<compile_context>
chip_gen: v7x
topology: tpu7x:2x2x1
jax: 0.10.0
libtpu: 0.0.40
codegen_flags: <defaults>
</compile_context>

<pallas_src>
import functools

import jax
import jax.numpy as jnp
from jax.experimental import pallas as pl
from jax.experimental.pallas import tpu as pltpu

LANES = 128
SUBLANES = 8


def _round_up(x, m):
    return (x + m - 1) // m * m


def _pick_row_tile(h, w, target_rows=512):
    """Largest row tile TH dividing H with TH*W <= target_rows (prefer lane-aligned tiles)."""
    if h * w <= target_rows:
        return h
    divisors = [d for d in range(1, h) if h % d == 0 and d * w <= target_rows]
    if not divisors:
        return h  # TODO(synk): masked edge tiles for H with no suitable divisor
    dense = [d for d in divisors if (d * w) % LANES == 0]
    return max(dense) if dense else max(divisors)


def _vmem_limit_bytes():
    """Per-generation VMEM budget: ~3/4 of physical (v7x 64MiB->48MiB, v5e/v6e 128->96)."""
    try:
        cap = pltpu.get_tpu_info().vmem_capacity_bytes
    except Exception:
        cap = 64 * 1024 * 1024  # conservative (v7x) fallback
    return min(int(cap * 3 // 4), 96 * 1024 * 1024)


def _conv_stats_kernel(x_ref, w_ref, conv_ref, sum_ref, sq_ref, *, TH, W, KH, KW, Cstore):
    """Pass 1: im2col-in-VMEM conv (single MXU dot), per-step BN partial sums, channel-major
    bf16 store of the conv tile.

    x_ref:    (Hp, Wp, Cin) bf16  whole padded image (resident across row tiles)
    w_ref:    (KH*KW*Cin, Cpad) bf16 weights (resident)
    conv_ref: (Cstore, TH*W) bf16  channel-major conv tile
    sum_ref/sq_ref: (1, Cpad) f32  per-step partial sums
    """
    cin = x_ref.shape[-1]
    row0 = pl.program_id(1) * TH
    if TH % SUBLANES == 0:
        row0 = pl.multiple_of(row0, TH)
    # Halo-inclusive row slab for this tile: (TH + KH - 1, Wp, Cin).
    slab = x_ref[pl.ds(row0, TH + KH - 1), :, :]
    # In-VMEM im2col: column order (kh, kw, c) matches w_hwio.reshape(KH*KW*Cin, Cout).
    taps = [slab[i:i + TH, j:j + W, :].reshape(TH * W, cin)
            for i in range(KH) for j in range(KW)]
    patches = jnp.concatenate(taps, axis=-1)                      # (TH*W, KH*KW*Cin)
    # One MXU matmul with f32 accumulation (K = KH*KW*Cin instead of Cin per tap).
    acc = jnp.dot(patches, w_ref[...], preferred_element_type=jnp.float32)  # (TH*W, Cpad)
    # Round once to bf16; the stats see exactly the values pass 2 will apply BN to.
    acc_q = acc.astype(jnp.bfloat16).astype(jnp.float32)
    sum_ref[...] = jnp.sum(acc_q, axis=0, keepdims=True)
    sq_ref[...] = jnp.sum(acc_q * acc_q, axis=0, keepdims=True)
    # Channel-major store: lane-dense (TH*W) rows, only Cstore (~Cout) channels reach HBM.
    conv_ref[...] = jnp.transpose(acc)[:Cstore, :].astype(jnp.bfloat16)


def _bn_relu_kernel(conv_ref, scale_ref, shift_ref, o_ref):
    """Pass 2: y = relu(conv * scale + shift), channel-major, no conv recompute."""
    y = conv_ref[...].astype(jnp.float32) * scale_ref[...] + shift_ref[...]
    o_ref[...] = jnp.maximum(y, 0.0)


def basic_conv2d_forward(x_nchw, w_hwio, gamma, beta, *, eps=1e-3):
    """Conv2d(bias=False, stride=1, 'same' pad) -> BatchNorm2d(training stats, eps) -> ReLU.

    x_nchw: (N, Cin, H, W) f32; w_hwio: (KH, KW, Cin, Cout); gamma/beta: (Cout,)
    Returns (N, Cout, H, W) f32 (NCHW, matching the PyTorch module).
    """
    N, Cin, H, W = x_nchw.shape
    KH, KW, _, Cout = w_hwio.shape
    ph, pw = KH // 2, KW // 2
    Hp, Wp = H + 2 * ph, W + 2 * pw
    Cpad = _round_up(Cout, LANES)       # MXU output-lane width (in-VMEM only)
    Cstore = _round_up(Cout, SUBLANES)  # channels actually written to HBM
    TH = _pick_row_tile(H, W)
    n_tiles = H // TH
    rows = TH * W

    # Layout glue: NCHW -> NHWC, spatial zero-pad, bf16 MXU operands. One bandwidth-
    # proportional XLA pass; no HBM im2col blow-up.
    x_pad = jnp.pad(jnp.transpose(x_nchw, (0, 2, 3, 1)),
                    ((0, 0), (ph, ph), (pw, pw), (0, 0))).astype(jnp.bfloat16)
    w2 = jnp.pad(w_hwio.astype(jnp.bfloat16).reshape(KH * KW * Cin, Cout),
                 ((0, 0), (0, Cpad - Cout)))

    cp = pltpu.CompilerParams(dimension_semantics=("parallel", "parallel"),
                              vmem_limit_bytes=_vmem_limit_bytes())

    flops1 = 2 * N * H * W * KH * KW * Cin * Cpad
    bytes1 = (x_pad.size * 2 + w2.size * 2 + N * Cstore * H * W * 2
              + 2 * N * n_tiles * Cpad * 4)

    # ---- pass 1: conv (one dot per tile) + per-step BN partial sums + bf16 conv store ----
    conv_t, psum, psq = pl.pallas_call(
        functools.partial(_conv_stats_kernel, TH=TH, W=W, KH=KH, KW=KW, Cstore=Cstore),
        grid=(N, n_tiles),
        in_specs=[
            pl.BlockSpec((None, Hp, Wp, Cin), lambda n, t: (n, 0, 0, 0)),
            pl.BlockSpec((KH * KW * Cin, Cpad), lambda n, t: (0, 0)),
        ],
        out_specs=[
            pl.BlockSpec((None, Cstore, None, rows), lambda n, t: (n, 0, t, 0)),
            pl.BlockSpec((None, 1, Cpad), lambda n, t: (n, t, 0)),
            pl.BlockSpec((None, 1, Cpad), lambda n, t: (n, t, 0)),
        ],
        out_shape=[
            jax.ShapeDtypeStruct((N, Cstore, n_tiles, rows), jnp.bfloat16),
            jax.ShapeDtypeStruct((N, n_tiles, Cpad), jnp.float32),
            jax.ShapeDtypeStruct((N, n_tiles, Cpad), jnp.float32),
        ],
        compiler_params=cp,
        cost_estimate=pl.CostEstimate(flops=flops1, transcendentals=0,
                                      bytes_accessed=bytes1),
    )(x_pad, w2)

    # Finalize BN stats (training-mode biased variance) and fold the affine:
    # y = conv * scale + shift.  Tiny O(Cout) math in the wrapper.
    count = jnp.float32(N * H * W)
    sum_c = jnp.sum(psum, axis=(0, 1))[:Cout]
    sq_c = jnp.sum(psq, axis=(0, 1))[:Cout]
    mean = sum_c / count
    var = jnp.maximum(sq_c / count - mean * mean, 0.0)
    inv_std = jax.lax.rsqrt(var + jnp.float32(eps))
    scale = gamma.astype(jnp.float32) * inv_std
    shift = beta.astype(jnp.float32) - mean * scale
    scale_p = jnp.pad(scale, (0, Cstore - Cout)).reshape(Cstore, 1)
    shift_p = jnp.pad(shift, (0, Cstore - Cout)).reshape(Cstore, 1)

    flops2 = 3 * N * Cstore * H * W
    bytes2 = N * Cstore * H * W * (2 + 4) + 2 * Cstore * 4

    # ---- pass 2: elementwise affine + ReLU on the stored bf16 conv (no recompute) ----
    # Output stays f32 to match the PyTorch module; emit bf16 here if the consumer allows
    # (halves writeback).
    out4 = pl.pallas_call(
        _bn_relu_kernel,
        grid=(N, n_tiles),
        in_specs=[
            pl.BlockSpec((None, Cstore, None, rows), lambda n, t: (n, 0, t, 0)),
            pl.BlockSpec((Cstore, 1), lambda n, t: (0, 0)),
            pl.BlockSpec((Cstore, 1), lambda n, t: (0, 0)),
        ],
        out_specs=pl.BlockSpec((None, Cstore, None, rows), lambda n, t: (n, 0, t, 0)),
        out_shape=jax.ShapeDtypeStruct((N, Cstore, n_tiles, rows), jnp.float32),
        compiler_params=cp,
        cost_estimate=pl.CostEstimate(flops=flops2, transcendentals=0,
                                      bytes_accessed=bytes2),
    )(conv_t, scale_p, shift_p)

    # (N, Cstore, n_tiles, TH*W) -> (N, Cstore, H*W) is a free contiguous reshape (row tiles
    # are stored in spatial order); drop the <=7 padded channels and reshape to NCHW with no
    # transpose.
    out = out4.reshape(N, Cstore, H * W)[:, :Cout].reshape(N, Cout, H, W)
    return out


def _reference_forward(x_nchw, w_hwio, gamma, beta, eps=1e-3):
    """Pure-JAX f32 reference matching the PyTorch forward (training-mode BN)."""
    KH, KW = w_hwio.shape[0], w_hwio.shape[1]
    w_oihw = jnp.transpose(w_hwio, (3, 2, 0, 1))
    conv = jax.lax.conv_general_dilated(
        x_nchw.astype(jnp.float32), w_oihw.astype(jnp.float32),
        window_strides=(1, 1), padding=((KH // 2, KH // 2), (KW // 2, KW // 2)),
        dimension_numbers=("NCHW", "OIHW", "NCHW"))
    mean = jnp.mean(conv, axis=(0, 2, 3), keepdims=True)
    var = jnp.mean((conv - mean) ** 2, axis=(0, 2, 3), keepdims=True)
    y = (conv - mean) * jax.lax.rsqrt(var + eps) * gamma.reshape(1, -1, 1, 1) \
        + beta.reshape(1, -1, 1, 1)
    return jnp.maximum(y, 0.0)


if __name__ == "__main__":
    # Small shapes consistent with the module: Conv2d(in=4, out=8, kernel_size=3, padding=1)
    N, Cin, Cout, H, W = 2, 4, 8, 16, 16
    KH = KW = 3

    key = jax.random.PRNGKey(0)
    kx, kw_, kg, kb = jax.random.split(key, 4)

    x = jax.random.normal(kx, (N, Cin, H, W), dtype=jnp.float32)
    w_hwio = 0.1 * jax.random.normal(kw_, (KH, KW, Cin, Cout), dtype=jnp.float32)
    gamma = 1.0 + 0.1 * jax.random.normal(kg, (Cout,), dtype=jnp.float32)
    beta = 0.05 * jax.random.normal(kb, (Cout,), dtype=jnp.float32)

    fwd = jax.jit(basic_conv2d_forward)
    out = fwd(x, w_hwio, gamma, beta)
    out = jax.block_until_ready(out)

    ref = _reference_forward(x, w_hwio, gamma, beta)
    assert out.shape == (N, Cout, H, W)
    # Tolerance accounts for bf16 MXU operands + bf16 conv intermediate (f32 accumulation);
    # structural errors would be O(1).
    assert jnp.allclose(out, ref, atol=5e-2, rtol=5e-2), "mismatch vs reference"

    print("KERNEL_OK")
</pallas_src>

<mosaic_0001>
module attributes {stable_mosaic.version = 11 : i64} {
  func.func @_bn_relu_kernel(%arg0: i32, %arg1: i32, %arg2: memref<1x8x1x256xbf16, #tpu.memory_space<vmem>>, %arg3: memref<8x1xf32, #tpu.memory_space<vmem>>, %arg4: memref<8x1xf32, #tpu.memory_space<vmem>>, %arg5: memref<1x8x1x256xf32, #tpu.memory_space<vmem>>) attributes {dimension_semantics = [#tpu.dimension_semantics<parallel>, #tpu.dimension_semantics<parallel>], iteration_bounds = array<i64: 2, 1>, scalar_prefetch = 0 : i64, scratch_operands = 0 : i64, tpu.core_type = #tpu.core_type<tc>, window_params = [{transform_indices = @transform_0, window_bounds = array<i64: 1, 8, 1, 256>}, {pipeline_mode = #tpu.pipeline_mode<synchronous>, transform_indices = @transform_1, window_bounds = array<i64: 8, 1>}, {pipeline_mode = #tpu.pipeline_mode<synchronous>, transform_indices = @transform_2, window_bounds = array<i64: 8, 1>}, {transform_indices = @transform_3, window_bounds = array<i64: 1, 8, 1, 256>}]} {
    %c0 = arith.constant 0 : index
    %c0_0 = arith.constant 0 : index
    %c0_1 = arith.constant 0 : index
    %c0_2 = arith.constant 0 : index
    %0 = vector.load %arg2[%c0, %c0_0, %c0_1, %c0_2] : memref<1x8x1x256xbf16, #tpu.memory_space<vmem>>, vector<1x8x1x256xbf16>
    %1 = vector.shape_cast %0 : vector<1x8x1x256xbf16> to vector<8x256xbf16>
    %2 = arith.extf %1 : vector<8x256xbf16> to vector<8x256xf32>
    %c0_3 = arith.constant 0 : index
    %c0_4 = arith.constant 0 : index
    %3 = vector.load %arg3[%c0_3, %c0_4] : memref<8x1xf32, #tpu.memory_space<vmem>>, vector<8x1xf32>
    %4 = vector.broadcast %3 : vector<8x1xf32> to vector<8x256xf32>
    %5 = arith.mulf %2, %4 : vector<8x256xf32>
    %c0_5 = arith.constant 0 : index
    %c0_6 = arith.constant 0 : index
    %6 = vector.load %arg4[%c0_5, %c0_6] : memref<8x1xf32, #tpu.memory_space<vmem>>, vector<8x1xf32>
    %7 = vector.broadcast %6 : vector<8x1xf32> to vector<8x256xf32>
    %8 = arith.addf %5, %7 : vector<8x256xf32>
    %cst = arith.constant 0.000000e+00 : f32
    %9 = vector.broadcast %cst : f32 to vector<8x256xf32>
    %10 = arith.maximumf %8, %9 : vector<8x256xf32>
    %c0_7 = arith.constant 0 : index
    %c0_8 = arith.constant 0 : index
    %c0_9 = arith.constant 0 : index
    %c0_10 = arith.constant 0 : index
    %11 = vector.load %arg5[%c0_7, %c0_8, %c0_9, %c0_10] : memref<1x8x1x256xf32, #tpu.memory_space<vmem>>, vector<1x8x1x256xf32>
    %12 = vector.shape_cast %11 : vector<1x8x1x256xf32> to vector<8x256xf32>
    %13 = vector.shape_cast %10 : vector<8x256xf32> to vector<1x8x1x256xf32>
    tpu.vector_store %arg5[%c0_7, %c0_8, %c0_9, %c0_10], %13 {strides = array<i32>} : memref<1x8x1x256xf32, #tpu.memory_space<vmem>>, vector<1x8x1x256xf32>,
    return
  }
  func.func @transform_0(%arg0: i32, %arg1: i32) -> (i32, i32, i32, i32) {
    %c0_i32 = arith.constant 0 : i32
    %c0_i32_0 = arith.constant 0 : i32
    %c0_i32_1 = arith.constant 0 : i32
    return %arg0, %c0_i32, %arg1, %c0_i32_0 : i32, i32, i32, i32
  }
  func.func @transform_1(%arg0: i32, %arg1: i32) -> (i32, i32) {
    %c0_i32 = arith.constant 0 : i32
    %c0_i32_0 = arith.constant 0 : i32
    %c0_i32_1 = arith.constant 0 : i32
    return %c0_i32, %c0_i32_0 : i32, i32
  }
  func.func @transform_2(%arg0: i32, %arg1: i32) -> (i32, i32) {
    %c0_i32 = arith.constant 0 : i32
    %c0_i32_0 = arith.constant 0 : i32
    %c0_i32_1 = arith.constant 0 : i32
    return %c0_i32, %c0_i32_0 : i32, i32
  }
  func.func @transform_3(%arg0: i32, %arg1: i32) -> (i32, i32, i32, i32) {
    %c0_i32 = arith.constant 0 : i32
    %c0_i32_0 = arith.constant 0 : i32
    %c0_i32_1 = arith.constant 0 : i32
    return %arg0, %c0_i32, %arg1, %c0_i32_0 : i32, i32, i32, i32
  }
}

module attributes {stable_mosaic.version = 11 : i64} {
  func.func @_conv_stats_kernel(%arg0: i32, %arg1: i32, %arg2: memref<1x18x18x4xbf16, #tpu.memory_space<vmem>>, %arg3: memref<36x128xbf16, #tpu.memory_space<vmem>>, %arg4: memref<1x8x1x256xbf16, #tpu.memory_space<vmem>>, %arg5: memref<1x1x128xf32, #tpu.memory_space<vmem>>, %arg6: memref<1x1x128xf32, #tpu.memory_space<vmem>>) attributes {dimension_semantics = [#tpu.dimension_semantics<parallel>, #tpu.dimension_semantics<parallel>], iteration_bounds = array<i64: 2, 1>, scalar_prefetch = 0 : i64, scratch_operands = 0 : i64, tpu.core_type = #tpu.core_type<tc>, window_params = [{transform_indices = @transform_0, window_bounds = array<i64: 1, 18, 18, 4>}, {pipeline_mode = #tpu.pipeline_mode<synchronous>, transform_indices = @transform_1, window_bounds = array<i64: 36, 128>}, {transform_indices = @transform_2, window_bounds = array<i64: 1, 8, 1, 256>}, {transform_indices = @transform_3, window_bounds = array<i64: 1, 1, 128>}, {transform_indices = @transform_4, window_bounds = array<i64: 1, 1, 128>}]} {
    %c16_i32 = arith.constant 16 : i32
    %0 = arith.muli %arg1, %c16_i32 : i32
    %1 = tpu.assume_multiple %0, 16 : i32
    %c0 = arith.constant 0 : index
    %2 = arith.index_cast %1 : i32 to index
    %c0_0 = arith.constant 0 : index
    %c0_1 = arith.constant 0 : index
    %3 = vector.load %arg2[%c0, %2, %c0_0, %c0_1] : memref<1x18x18x4xbf16, #tpu.memory_space<vmem>>, vector<1x18x18x4xbf16>
    %4 = vector.shape_cast %3 : vector<1x18x18x4xbf16> to vector<18x18x4xbf16>
    %5 = vector.extract_strided_slice %4 {offsets = [0, 0, 0], sizes = [16, 16, 4], strides = [1, 1, 1]} : vector<18x18x4xbf16> to vector<16x16x4xbf16>
    %6 = vector.shape_cast %5 : vector<16x16x4xbf16> to vector<256x4xbf16>
    %7 = vector.extract_strided_slice %4 {offsets = [0, 1, 0], sizes = [16, 16, 4], strides = [1, 1, 1]} : vector<18x18x4xbf16> to vector<16x16x4xbf16>
    %8 = vector.shape_cast %7 : vector<16x16x4xbf16> to vector<256x4xbf16>
    %9 = vector.extract_strided_slice %4 {offsets = [0, 2, 0], sizes = [16, 16, 4], strides = [1, 1, 1]} : vector<18x18x4xbf16> to vector<16x16x4xbf16>
    %10 = vector.shape_cast %9 : vector<16x16x4xbf16> to vector<256x4xbf16>
    %11 = vector.extract_strided_slice %4 {offsets = [1, 0, 0], sizes = [16, 16, 4], strides = [1, 1, 1]} : vector<18x18x4xbf16> to vector<16x16x4xbf16>
    %12 = vector.shape_cast %11 : vector<16x16x4xbf16> to vector<256x4xbf16>
    %13 = vector.extract_strided_slice %4 {offsets = [1, 1, 0], sizes = [16, 16, 4], strides = [1, 1, 1]} : vector<18x18x4xbf16> to vector<16x16x4xbf16>
    %14 = vector.shape_cast %13 : vector<16x16x4xbf16> to vector<256x4xbf16>
    %15 = vector.extract_strided_slice %4 {offsets = [1, 2, 0], sizes = [16, 16, 4], strides = [1, 1, 1]} : vector<18x18x4xbf16> to vector<16x16x4xbf16>
    %16 = vector.shape_cast %15 : vector<16x16x4xbf16> to vector<256x4xbf16>
    %17 = vector.extract_strided_slice %4 {offsets = [2, 0, 0], sizes = [16, 16, 4], strides = [1, 1, 1]} : vector<18x18x4xbf16> to vector<16x16x4xbf16>
    %18 = vector.shape_cast %17 : vector<16x16x4xbf16> to vector<256x4xbf16>
    %19 = vector.extract_strided_slice %4 {offsets = [2, 1, 0], sizes = [16, 16, 4], strides = [1, 1, 1]} : vector<18x18x4xbf16> to vector<16x16x4xbf16>
    %20 = vector.shape_cast %19 : vector<16x16x4xbf16> to vector<256x4xbf16>
    %21 = vector.extract_strided_slice %4 {offsets = [2, 2, 0], sizes = [16, 16, 4], strides = [1, 1, 1]} : vector<18x18x4xbf16> to vector<16x16x4xbf16>
    %22 = vector.shape_cast %21 : vector<16x16x4xbf16> to vector<256x4xbf16>
    %23 = tpu.concatenate %6, %8, %10, %12, %14, %16, %18, %20, %22 in 1 : vector<256x4xbf16>, vector<256x4xbf16>, vector<256x4xbf16>, vector<256x4xbf16>, vector<256x4xbf16>, vector<256x4xbf16>, vector<256x4xbf16>, vector<256x4xbf16>, vector<256x4xbf16> -> vector<256x36xbf16>
    %c0_2 = arith.constant 0 : index
    %c0_3 = arith.constant 0 : index
    %24 = vector.load %arg3[%c0_2, %c0_3] : memref<36x128xbf16, #tpu.memory_space<vmem>>, vector<36x128xbf16>
    %cst = arith.constant dense<0.000000e+00> : vector<256x128xf32>
    %25 = tpu.matmul %23, %24, %cst {dimension_numbers = #tpu.dot_dimension_numbers<[1], [0], [0], [1], [0, 0, 1, 1], [], []>} : vector<256x36xbf16>, vector<36x128xbf16>, vector<256x128xf32> -> vector<256x128xf32>
    %26 = arith.truncf %25 : vector<256x128xf32> to vector<256x128xbf16>
    %27 = arith.extf %26 : vector<256x128xbf16> to vector<256x128xf32>
    %cst_4 = arith.constant dense<0.000000e+00> : vector<128xf32>
    %28 = vector.multi_reduction <add>, %27, %cst_4 [0] : vector<256x128xf32> to vector<128xf32>
    %29 = vector.shape_cast %28 : vector<128xf32> to vector<1x128xf32>
    %c0_5 = arith.constant 0 : index
    %c0_6 = arith.constant 0 : index
    %c0_7 = arith.constant 0 : index
    %30 = vector.load %arg5[%c0_5, %c0_6, %c0_7] : memref<1x1x128xf32, #tpu.memory_space<vmem>>, vector<1x1x128xf32>
    %31 = vector.shape_cast %30 : vector<1x1x128xf32> to vector<1x128xf32>
    %32 = vector.shape_cast %29 : vector<1x128xf32> to vector<1x1x128xf32>
    tpu.vector_store %arg5[%c0_5, %c0_6, %c0_7], %32 {strides = array<i32>} : memref<1x1x128xf32, #tpu.memory_space<vmem>>, vector<1x1x128xf32>,
    %33 = arith.mulf %27, %27 : vector<256x128xf32>
    %cst_8 = arith.constant dense<0.000000e+00> : vector<128xf32>
    %34 = vector.multi_reduction <add>, %33, %cst_8 [0] : vector<256x128xf32> to vector<128xf32>
    %35 = vector.shape_cast %34 : vector<128xf32> to vector<1x128xf32>
    %c0_9 = arith.constant 0 : index
    %c0_10 = arith.constant 0 : index
    %c0_11 = arith.constant 0 : index
    %36 = vector.load %arg6[%c0_9, %c0_10, %c0_11] : memref<1x1x128xf32, #tpu.memory_space<vmem>>, vector<1x1x128xf32>
    %37 = vector.shape_cast %36 : vector<1x1x128xf32> to vector<1x128xf32>
    %38 = vector.shape_cast %35 : vector<1x128xf32> to vector<1x1x128xf32>
    tpu.vector_store %arg6[%c0_9, %c0_10, %c0_11], %38 {strides = array<i32>} : memref<1x1x128xf32, #tpu.memory_space<vmem>>, vector<1x1x128xf32>,
    %39 = tpu.transpose %25, [1, 0] : vector<256x128xf32> -> vector<128x256xf32>
    %40 = vector.extract_strided_slice %39 {offsets = [0, 0], sizes = [8, 256], strides = [1, 1]} : vector<128x256xf32> to vector<8x256xf32>
    %41 = arith.truncf %40 : vector<8x256xf32> to vector<8x256xbf16>
    %c0_12 = arith.constant 0 : index
    %c0_13 = arith.constant 0 : index
    %c0_14 = arith.constant 0 : index
    %c0_15 = arith.constant 0 : index
    %42 = vector.load %arg4[%c0_12, %c0_13, %c0_14, %c0_15] : memref<1x8x1x256xbf16, #tpu.memory_space<vmem>>, vector<1x8x1x256xbf16>
    %43 = vector.shape_cast %42 : vector<1x8x1x256xbf16> to vector<8x256xbf16>
    %44 = vector.shape_cast %41 : vector<8x256xbf16> to vector<1x8x1x256xbf16>
    tpu.vector_store %arg4[%c0_12, %c0_13, %c0_14, %c0_15], %44 {strides = array<i32>} : memref<1x8x1x256xbf16, #tpu.memory_space<vmem>>, vector<1x8x1x256xbf16>,
    return
  }
  func.func @transform_0(%arg0: i32, %arg1: i32) -> (i32, i32, i32, i32) {
    %c0_i32 = arith.constant 0 : i32
    %c0_i32_0 = arith.constant 0 : i32
    %c0_i32_1 = arith.constant 0 : i32
    %c0_i32_2 = arith.constant 0 : i32
    return %arg0, %c0_i32, %c0_i32_0, %c0_i32_1 : i32, i32, i32, i32
  }
  func.func @transform_1(%arg0: i32, %arg1: i32) -> (i32, i32) {
    %c0_i32 = arith.constant 0 : i32
    %c0_i32_0 = arith.constant 0 : i32
    %c0_i32_1 = arith.constant 0 : i32
    return %c0_i32, %c0_i32_0 : i32, i32
  }
  func.func @transform_2(%arg0: i32, %arg1: i32) -> (i32, i32, i32, i32) {
    %c0_i32 = arith.constant 0 : i32
    %c0_i32_0 = arith.constant 0 : i32
    %c0_i32_1 = arith.constant 0 : i32
    return %arg0, %c0_i32, %arg1, %c0_i32_0 : i32, i32, i32, i32
  }
  func.func @transform_3(%arg0: i32, %arg1: i32) -> (i32, i32, i32) {
    %c0_i32 = arith.constant 0 : i32
    %c0_i32_0 = arith.constant 0 : i32
    return %arg0, %arg1, %c0_i32 : i32, i32, i32
  }
  func.func @transform_4(%arg0: i32, %arg1: i32) -> (i32, i32, i32) {
    %c0_i32 = arith.constant 0 : i32
    %c0_i32_0 = arith.constant 0 : i32
    return %arg0, %arg1, %c0_i32 : i32, i32, i32
  }
}

</mosaic_0001>

<llo_original>
// kernel: basic_conv2d_forward.3
$region0: #{basic_conv2d_forward.3}
  #allocation0 [shape = 'u32[]', space=smem, size = 0x4, offset = 0x4, fixed_abs, tag = 'smem constant byte address 0x4 - core index']
  #allocation1 [shape = 'u32[144,128]{1,0:T(1,128)}', space=vmem, size = 0x12000, scoped, tag = 'internal scratch']
  %s0 = inlined_call_operand.vmem [shape: bf16[2,8,1,256], index: 0, kind: input, shape index: {}]
  %s1 = inlined_call_operand.vmem [shape: f32[8,1], index: 1, kind: input, shape index: {}]
  %s2 = inlined_call_operand.vmem [shape: f32[8,1], index: 2, kind: input, shape index: {}]
  %s3 = inlined_call_operand.vmem [shape: f32[2,8,1,256], index: 3, kind: output, shape index: {}]
  %s4 = sld [smem:[#allocation0]]
  $region45: #{basic_conv2d_forward.3} parent=0
    _
  %s6 = ssub.s32 1, %s4
  %s7 = scalar_select 0, %s6, %s4
  loop: start=0, step=1, limit=4
  $region2: #{basic_conv2d_forward.3} parent=0 // loop_pre_header
    _
  $region3: #{basic_conv2d_forward.3} parent=0 // loop_header
    %s9 = sphi 0, %s13
    %p10 = scmp.ge.s32.totalorder %s9, 4
    %s16 = sphi 0, %s28
    %s17 = sphi 0, %s24
    %s18 = sphi 0, %s16
    %s19 = sphi 0, %s17
    %s20 = sphi 0, %s18
    %s21 = sphi 0, %s19
    %s33 = sphi 0, %s35
    %s36 = sphi 0, %s33
    %s37 = sphi 0, %s36
    %s53 = sphi 0, %s37
    %s57 = sphi 0, %s57
    %s59 = sphi 0, %s57
    %s60 = sphi 0, %s59
    %s74 = sphi 0, %s60
    %s78 = sphi 0, %s78
    %s80 = sphi 0, %s78
    %s81 = sphi 0, %s80
    %s95 = sphi 0, %s81
    %s103 = sphi 0, %s105
    %s106 = sphi 0, %s103
    %s107 = sphi 0, %s106
    %s123 = sphi 0, %s107
  $region4: #{basic_conv2d_forward.3} parent=0 // loop_header_branch
    %12 = sbr.rel (%p10) target = $region8
  $region5: #{basic_conv2d_forward.3} parent=0 // loop_body
    %s14 = ssub.s32 %s9, 1
    %s15 = ssub.s32 %s9, 2
    %s22 = sadd.s32 1, %s17
    %p23 = scmp.ge.s32.totalorder %s22, 1
    %s24 = scalar_select %p23, 0, %s22
    %s25 = sadd.s32 1, %s16
    %s26 = scalar_select %p23, %s25, %s16
    %p27 = scmp.ge.s32.totalorder %s26, 2
    %s28 = scalar_select %p27, 0, %s26
    %s29 = ssub.s32 %s16, %s28
    %s30 = ssub.s32 %s17, %s24
    %s31 = sor.u32 %s29, %s30
    %p32 = scmp.eq.s32.totalorder %s31, 0
    %s34 = sadd.s32 %s33, 1
    %s35 = scalar_select %p32, %s33, %s34
    %p38 = pneg %p32
    %p39 = scmp.eq.s32.totalorder %s9, 1
    %p40 = por %p38, %p39
    %p41 = scmp.ne.s32.totalorder %s33, %s36
    %p42 = scmp.eq.s32.totalorder %s9, 0
    %p43 = por %p41, %p42
    %p44 = scmp.ne.s32.totalorder %s33, %s36
    %p45 = scmp.eq.s32.totalorder %s14, 1
    %p46 = por %p44, %p45
    %p47 = scmp.ne.s32.totalorder %s36, %s37
    %p48 = scmp.eq.s32.totalorder %s14, 0
    %p49 = por %p47, %p48
    %p50 = scmp.ne.s32.totalorder %s36, %s37
    %p51 = scmp.eq.s32.totalorder %s15, 1
    %p52 = por %p50, %p51
    %p54 = scmp.ne.s32.totalorder %s37, %s53
    %p55 = scmp.eq.s32.totalorder %s15, 0
    %p56 = por %p54, %p55
    %s58 = sadd.s32 %s57, 1
    %p61 = scmp.eq.s32.totalorder %s9, 1
    %p62 = scmp.ne.s32.totalorder %s57, %s59
    %p63 = scmp.eq.s32.totalorder %s9, 0
    %p64 = por %p62, %p63
    %p65 = scmp.ne.s32.totalorder %s57, %s59
    %p66 = scmp.eq.s32.totalorder %s14, 1
    %p67 = por %p65, %p66
    %p68 = scmp.ne.s32.totalorder %s59, %s60
    %p69 = scmp.eq.s32.totalorder %s14, 0
    %p70 = por %p68, %p69
    %p71 = scmp.ne.s32.totalorder %s59, %s60
    %p72 = scmp.eq.s32.totalorder %s15, 1
    %p73 = por %p71, %p72
    %p75 = scmp.ne.s32.totalorder %s60, %s74
    %p76 = scmp.eq.s32.totalorder %s15, 0
    %p77 = por %p75, %p76
    %s79 = sadd.s32 %s78, 1
    %p82 = scmp.eq.s32.totalorder %s9, 1
    %p83 = scmp.ne.s32.totalorder %s78, %s80
    %p84 = scmp.eq.s32.totalorder %s9, 0
    %p85 = por %p83, %p84
    %p86 = scmp.ne.s32.totalorder %s78, %s80
    %p87 = scmp.eq.s32.totalorder %s14, 1
    %p88 = por %p86, %p87
    %p89 = scmp.ne.s32.totalorder %s80, %s81
    %p90 = scmp.eq.s32.totalorder %s14, 0
    %p91 = por %p89, %p90
    %p92 = scmp.ne.s32.totalorder %s80, %s81
    %p93 = scmp.eq.s32.totalorder %s15, 1
    %p94 = por %p92, %p93
    %p96 = scmp.ne.s32.totalorder %s81, %s95
    %p97 = scmp.eq.s32.totalorder %s15, 0
    %p98 = por %p96, %p97
    %s99 = ssub.s32 %s16, %s28
    %s100 = ssub.s32 %s17, %s24
    %s101 = sor.u32 %s99, %s100
    %p102 = scmp.eq.s32.totalorder %s101, 0
    %s104 = sadd.s32 %s103, 1
    %s105 = scalar_select %p102, %s103, %s104
    %p108 = pneg %p102
    %p109 = scmp.eq.s32.totalorder %s9, 1
    %p110 = por %p108, %p109
    %p111 = scmp.ne.s32.totalorder %s103, %s106
    %p112 = scmp.eq.s32.totalorder %s9, 0
    %p113 = por %p111, %p112
    %p114 = scmp.ne.s32.totalorder %s103, %s106
    %p115 = scmp.eq.s32.totalorder %s14, 1
    %p116 = por %p114, %p115
    %p117 = scmp.ne.s32.totalorder %s106, %s107
    %p118 = scmp.eq.s32.totalorder %s14, 0
    %p119 = por %p117, %p118
    %p120 = scmp.ne.s32.totalorder %s106, %s107
    %p121 = scmp.eq.s32.totalorder %s15, 1
    %p122 = por %p120, %p121
    %p124 = scmp.ne.s32.totalorder %s107, %s123
    %p125 = scmp.eq.s32.totalorder %s15, 0
    %p126 = por %p124, %p125
    %p127 = scmp.le.s32.totalorder 1, %s9
    %p128 = scmp.lt.s32.totalorder %s9, 3
    %p129 = pnand %p127, %p128
    %p130 = pneg %p129
    // Predicated region
    $region9: #{basic_conv2d_forward.3} parent=5 // pred_check
      _
    $region10: #{basic_conv2d_forward.3} parent=5 // pred_check_branch
      %132 = sbr.rel (%p129) target = $region12
    $region11: #{basic_conv2d_forward.3} parent=5 // pred_region
      %s133 = ssub.s32 %s9, 1
      // Predicated region
      $region13: #{basic_conv2d_forward.3} parent=11 // pred_check
        %p134 = pneg %p70
      $region14: #{basic_conv2d_forward.3} parent=11 // pred_check_branch
        %136 = sbr.rel (%p134) target = $region16
      $region15: #{basic_conv2d_forward.3} parent=11 // pred_region
        _
      $region16: #{basic_conv2d_forward.3} parent=11 // pred_fallthru
        _
      // Predicated region
      $region17: #{basic_conv2d_forward.3} parent=11 // pred_check
        %p137 = pneg %p91
      $region18: #{basic_conv2d_forward.3} parent=11 // pred_check_branch
        %139 = sbr.rel (%p137) target = $region20
      $region19: #{basic_conv2d_forward.3} parent=11 // pred_region
        _
      $region20: #{basic_conv2d_forward.3} parent=11 // pred_fallthru
        _
    $region12: #{basic_conv2d_forward.3} parent=5 // pred_fallthru
      _
    %p140 = scmp.lt.s32.totalorder %s9, 2
    // Predicated region
    $region21: #{basic_conv2d_forward.3} parent=5 // pred_check
      %p141 = pneg %p140
    $region22: #{basic_conv2d_forward.3} parent=5 // pred_check_branch
      %143 = sbr.rel (%p141) target = $region24
    $region23: #{basic_conv2d_forward.3} parent=5 // pred_region
      // Predicated region
      $region25: #{basic_conv2d_forward.3} parent=23 // pred_check
        %p144 = pneg %p43
      $region26: #{basic_conv2d_forward.3} parent=23 // pred_check_branch
        %146 = sbr.rel (%p144) target = $region28
      $region27: #{basic_conv2d_forward.3} parent=23 // pred_region
        %p147 = scmp.lt.s32.totalorder %s16, 1
        %s148 = scalar_select %p147, %s16, 1
        %p149 = scmp.lt.s32.totalorder %s17, 0
        %s150 = scalar_select %p149, %s17, 0
        %s151 = smul.addr %s150, 2
        %s152 = smul.addr %s148, 16
        %s153 = sadd.s32 %s151, %s152
        %s154 = scalar_lea.vmem %s0, %s153
      $region28: #{basic_conv2d_forward.3} parent=23 // pred_fallthru
        _
    $region24: #{basic_conv2d_forward.3} parent=5 // pred_fallthru
      _
    %p155 = scmp.le.s32.totalorder 1, %s9
    %p156 = scmp.lt.s32.totalorder %s9, 3
    %p157 = pnand %p155, %p156
    %p158 = pneg %p157
    // Predicated region
    $region29: #{basic_conv2d_forward.3} parent=5 // pred_check
      _
    $region30: #{basic_conv2d_forward.3} parent=5 // pred_check_branch
      %160 = sbr.rel (%p157) target = $region32
    $region31: #{basic_conv2d_forward.3} parent=5 // pred_region
      %s161 = ssub.s32 %s9, 1
      %p162 = scmp.lt.s32.totalorder %s18, 1
      %s163 = scalar_select %p162, %s18, 1
      %p164 = scmp.lt.s32.totalorder %s19, 0
      %s165 = scalar_select %p164, %s19, 0
      %s166 = smul.addr %s165, 2
      %s167 = smul.addr %s163, 16
      %s168 = sadd.s32 %s166, %s167
      %s169 = scalar_lea.vmem %s0, %s168
      %p170 = pneg %p49
      %p171 = pneg %p46
      %p172 = pneg %p70
      %p173 = pneg %p67
      %p174 = pneg %p91
      %p175 = pneg %p88
      %p176 = pneg %p119
      %p177 = pneg %p116
      %p178 = scmp.lt.s32.totalorder %s18, 1
      %s179 = scalar_select %p178, %s18, 1
      %p180 = scmp.lt.s32.totalorder %s19, 0
      %s181 = scalar_select %p180, %s19, 0
      %s182 = smul.addr %s181, 2
      %s183 = smul.addr %s179, 16
      %s184 = sadd.s32 %s182, %s183
      %s185 = scalar_lea.vmem %s3, %s184
      %p186 = scmp.lt.s32.totalorder %s18, 1
      %s187 = scalar_select %p186, %s18, 1
      %p188 = scmp.lt.s32.totalorder %s19, 0
      %s189 = scalar_select %p188, %s19, 0
      %s190 = smul.addr %s189, 2
      %s191 = smul.addr %s187, 16
      %s192 = sadd.s32 %s190, %s191
      %s193 = scalar_lea.vmem %s0, %s192
      %p194 = scmp.lt.s32.totalorder %s18, 1
      %s195 = scalar_select %p194, %s18, 1
      %p196 = scmp.lt.s32.totalorder %s19, 0
      %s197 = scalar_select %p196, %s19, 0
      %s198 = smul.addr %s197, 2
      %s199 = smul.addr %s195, 16
      %s200 = sadd.s32 %s198, %s199
      %s201 = scalar_lea.vmem %s3, %s200
      %v202 = vld [vmem:[%s193] sm:$0x3]
      %v203 = vld [vmem:[%s193 + $0x2] sm:$0x3]
      %v204 = vld [vmem:[%s193 + $0x4] sm:$0x3]
      %v205 = vld [vmem:[%s193 + $0x6] sm:$0x3]
      %v206 = vld [vmem:[%s193 + $0x8] sm:$0x3]
      %v207 = vld [vmem:[%s193 + $0xa] sm:$0x3]
      %v208 = vld [vmem:[%s193 + $0xc] sm:$0x3]
      %v209 = vld [vmem:[%s193 + $0xe] sm:$0x3]
      %v210 = vunpack.c.l.bf16 %v202
      %v211 = vunpack.c.l.bf16 %v203
      %v212 = vunpack.c.l.bf16 %v204
      %v213 = vunpack.c.l.bf16 %v205
      %v214 = vunpack.c.l.bf16 %v206
      %v215 = vunpack.c.l.bf16 %v207
      %v216 = vunpack.c.l.bf16 %v208
      %v217 = vunpack.c.l.bf16 %v209
      %v218 = vld [vmem:[%s1] sm:$0xff]
      %220 = vset.pattern.permute.xlu0 0
      %221 = vperm.xlu0 %220, %v218
      %v222 = vpop.permute.xlu0 %221
      %v224 = vunpack.c.l.s4 269488144
      %v225 = vunpack.c.0.s8 %v224
      %v226 = vlaneseq
      %v227 = vshrl.u32 %v226, 7
      %v228 = vsub.s32 %v225, %v227
      %v229 = vrot.slane %v222, %v228
      %v231 = vunpack.c.l.s4 842150450
      %v232 = vunpack.c.0.s8 %v231
      %v233 = vlaneseq
      %v234 = vshrl.u32 %v233, 7
      %v235 = vsub.s32 %v232, %v234
      %v236 = vrot.slane %v222, %v235
      %v238 = vunpack.c.l.s4 1414812756
      %v239 = vunpack.c.0.s8 %v238
      %v240 = vlaneseq
      %v241 = vshrl.u32 %v240, 7
      %v242 = vsub.s32 %v239, %v241
      %v243 = vrot.slane %v222, %v242
      %v245 = vunpack.c.l.s4 1987475062
      %v246 = vunpack.c.0.s8 %v245
      %v247 = vlaneseq
      %v248 = vshrl.u32 %v247, 7
      %v249 = vsub.s32 %v246, %v248
      %v250 = vrot.slane %v222, %v249
      %v251 = vrot.slane %v229, 1
      %v252 = vrot.slane %v236, 1
      %v253 = vrot.slane %v243, 1
      %v254 = vrot.slane %v250, 1
      %v263 = vmul.f32 %v210, %v229
      %v264 = vmul.f32 %v211, %v251
      %v265 = vmul.f32 %v212, %v236
      %v266 = vmul.f32 %v213, %v252
      %v267 = vmul.f32 %v214, %v243
      %v268 = vmul.f32 %v215, %v253
      %v269 = vmul.f32 %v216, %v250
      %v270 = vmul.f32 %v217, %v254
      %v271 = vld [vmem:[%s2] sm:$0xff]
      %273 = vset.pattern.permute.xlu0 0
      %274 = vperm.xlu0 %273, %v271
      %v275 = vpop.permute.xlu0 %274
      %v277 = vunpack.c.l.s4 269488144
      %v278 = vunpack.c.0.s8 %v277
      %v279 = vlaneseq
      %v280 = vshrl.u32 %v279, 7
      %v281 = vsub.s32 %v278, %v280
      %v282 = vrot.slane %v275, %v281
      %v284 = vunpack.c.l.s4 842150450
      %v285 = vunpack.c.0.s8 %v284
      %v286 = vlaneseq
      %v287 = vshrl.u32 %v286, 7
      %v288 = vsub.s32 %v285, %v287
      %v289 = vrot.slane %v275, %v288
      %v291 = vunpack.c.l.s4 1414812756
      %v292 = vunpack.c.0.s8 %v291
      %v293 = vlaneseq
      %v294 = vshrl.u32 %v293, 7
      %v295 = vsub.s32 %v292, %v294
      %v296 = vrot.slane %v275, %v295
      %v298 = vunpack.c.l.s4 1987475062
      %v299 = vunpack.c.0.s8 %v298
      %v300 = vlaneseq
      %v301 = vshrl.u32 %v300, 7
      %v302 = vsub.s32 %v299, %v301
      %v303 = vrot.slane %v275, %v302
      %v304 = vrot.slane %v282, 1
      %v305 = vrot.slane %v289, 1
      %v306 = vrot.slane %v296, 1
      %v307 = vrot.slane %v303, 1
      %v316 = vadd.f32 %v263, %v282
      %v317 = vadd.f32 %v264, %v304
      %v318 = vadd.f32 %v265, %v289
      %v319 = vadd.f32 %v266, %v305
      %v320 = vadd.f32 %v267, %v296
      %v321 = vadd.f32 %v268, %v306
      %v322 = vadd.f32 %v269, %v303
      %v323 = vadd.f32 %v270, %v307
      %v324 = vmax.f32 %v316, 0.0
      %v325 = vmax.f32 %v317, 0.0
      %v326 = vmax.f32 %v318, 0.0
      %v327 = vmax.f32 %v319, 0.0
      %v328 = vmax.f32 %v320, 0.0
      %v329 = vmax.f32 %v321, 0.0
      %v330 = vmax.f32 %v322, 0.0
      %v331 = vmax.f32 %v323, 0.0
      %v341 = vunpack.c.l.s4 1966171168
      %v342 = vunpack.c.0.s8 %v341
      %v343 = vlaneseq
      %v344 = vshrl.u32 %v343, 7
      %v345 = vsub.s32 %v342, %v344
      %v346 = vrot.slane %v324, %v345
      %v348 = vunpack.c.l.s4 1966171168
      %v349 = vunpack.c.0.s8 %v348
      %v350 = vlaneseq
      %v351 = vshrl.u32 %v350, 7
      %v352 = vsub.s32 %v349, %v351
      %v353 = vrot.slane %v325, %v352
      %v355 = vunpack.c.l.s4 1966171168
      %v356 = vunpack.c.0.s8 %v355
      %v357 = vlaneseq
      %v358 = vshrl.u32 %v357, 7
      %v359 = vsub.s32 %v356, %v358
      %v360 = vrot.slane %v326, %v359
      %v362 = vunpack.c.l.s4 1966171168
      %v363 = vunpack.c.0.s8 %v362
      %v364 = vlaneseq
      %v365 = vshrl.u32 %v364, 7
      %v366 = vsub.s32 %v363, %v365
      %v367 = vrot.slane %v327, %v366
      %v369 = vunpack.c.l.s4 1966171168
      %v370 = vunpack.c.0.s8 %v369
      %v371 = vlaneseq
      %v372 = vshrl.u32 %v371, 7
      %v373 = vsub.s32 %v370, %v372
      %v374 = vrot.slane %v328, %v373
      %v376 = vunpack.c.l.s4 1966171168
      %v377 = vunpack.c.0.s8 %v376
      %v378 = vlaneseq
      %v379 = vshrl.u32 %v378, 7
      %v380 = vsub.s32 %v377, %v379
      %v381 = vrot.slane %v329, %v380
      %v383 = vunpack.c.l.s4 1966171168
      %v384 = vunpack.c.0.s8 %v383
      %v385 = vlaneseq
      %v386 = vshrl.u32 %v385, 7
      %v387 = vsub.s32 %v384, %v386
      %v388 = vrot.slane %v330, %v387
      %v390 = vunpack.c.l.s4 1966171168
      %v391 = vunpack.c.0.s8 %v390
      %v392 = vlaneseq
      %v393 = vshrl.u32 %v392, 7
      %v394 = vsub.s32 %v391, %v393
      %v395 = vrot.slane %v331, %v394
      %v404 = vlaneseq
      %vm405 = vcmp.ge.s32.totalorder %v404, 0
      %vm406 = vcmp.lt.s32.totalorder %v404, 256
      %vm407 = vmand %vm405, %vm406
      %408 = vst.msk [vmem:[%s201] sm:$0x3] %vm407, %v346
      %409 = vst.msk [vmem:[%s201 + $0x2] sm:$0x3] %vm407, %v353
      %410 = vst.msk [vmem:[%s201 + $0x4] sm:$0x3] %vm407, %v360
      %411 = vst.msk [vmem:[%s201 + $0x6] sm:$0x3] %vm407, %v367
      %412 = vst.msk [vmem:[%s201 + $0x8] sm:$0x3] %vm407, %v374
      %413 = vst.msk [vmem:[%s201 + $0xa] sm:$0x3] %vm407, %v381
      %414 = vst.msk [vmem:[%s201 + $0xc] sm:$0x3] %vm407, %v388
      %415 = vst.msk [vmem:[%s201 + $0xe] sm:$0x3] %vm407, %v395
      %p416 = scmp.lt.s32.totalorder %s18, 1
      %s417 = scalar_select %p416, %s18, 1
      %p418 = scmp.lt.s32.totalorder %s19, 0
      %s419 = scalar_select %p418, %s19, 0
      %s420 = smul.addr %s419, 2
      %s421 = smul.addr %s417, 16
      %s422 = sadd.s32 %s420, %s421
      %s423 = scalar_lea.vmem %s3, %s422
      // Predicated region
      $region33: #{basic_conv2d_forward.3} parent=31 // pred_check
        %p424 = pneg %p116
      $region34: #{basic_conv2d_forward.3} parent=31 // pred_check_branch
        %426 = sbr.rel (%p424) target = $region36
      $region35: #{basic_conv2d_forward.3} parent=31 // pred_region
        _
      $region36: #{basic_conv2d_forward.3} parent=31 // pred_fallthru
        _
    $region32: #{basic_conv2d_forward.3} parent=5 // pred_fallthru
      _
    %p427 = scmp.le.s32.totalorder 2, %s9
    // Predicated region
    $region37: #{basic_conv2d_forward.3} parent=5 // pred_check
      %p428 = pneg %p427
    $region38: #{basic_conv2d_forward.3} parent=5 // pred_check_branch
      %430 = sbr.rel (%p428) target = $region40
    $region39: #{basic_conv2d_forward.3} parent=5 // pred_region
      %s431 = ssub.s32 %s9, 2
      // Predicated region
      $region41: #{basic_conv2d_forward.3} parent=39 // pred_check
        %p432 = pneg %p122
      $region42: #{basic_conv2d_forward.3} parent=39 // pred_check_branch
        %434 = sbr.rel (%p432) target = $region44
      $region43: #{basic_conv2d_forward.3} parent=39 // pred_region
        %p435 = scmp.lt.s32.totalorder %s20, 1
        %s436 = scalar_select %p435, %s20, 1
        %p437 = scmp.lt.s32.totalorder %s21, 0
        %s438 = scalar_select %p437, %s21, 0
        %s439 = smul.addr %s438, 2
        %s440 = smul.addr %s436, 16
        %s441 = sadd.s32 %s439, %s440
        %s442 = scalar_lea.vmem %s3, %s441
      $region44: #{basic_conv2d_forward.3} parent=39 // pred_fallthru
        _
    $region40: #{basic_conv2d_forward.3} parent=5 // pred_fallthru
      _
  $region6: #{basic_conv2d_forward.3} parent=0 // loop_footer
    %s13 = sadd.s32 1, %s9
  $region7: #{basic_conv2d_forward.3} parent=0 // loop_footer_branch
    %8 = sbr.rel target = $region3
  $region8: #{basic_conv2d_forward.3} parent=0 // loop_exit
    _

// kernel: basic_conv2d_forward.2
$region0: #{basic_conv2d_forward.2}
  #allocation0 [shape = 'u32[]', space=smem, size = 0x4, offset = 0x4, fixed_abs, tag = 'smem constant byte address 0x4 - core index']
  #allocation1 [shape = 'u32[144,128]{1,0:T(1,128)}', space=vmem, size = 0x12000, scoped, tag = 'internal scratch']
  %s0 = inlined_call_operand.vmem [shape: bf16[2,18,18,4], index: 0, kind: input, shape index: {}]
  %s1 = inlined_call_operand.vmem [shape: bf16[36,128], index: 1, kind: input, shape index: {}]
  %s2 = inlined_call_operand.vmem [shape: bf16[2,8,1,256], index: 2, kind: output, shape index: {0}]
  %s3 = inlined_call_operand.vmem [shape: f32[2,1,128], index: 3, kind: output, shape index: {1}]
  %s4 = inlined_call_operand.vmem [shape: f32[2,1,128], index: 4, kind: output, shape index: {2}]
  %5 = xla_tuple %s2, %s3, %s4
  %s6 = sld [smem:[#allocation0]]
  $region57: #{basic_conv2d_forward.2} parent=0
    _
  %s8 = ssub.s32 1, %s6
  %s9 = scalar_select 0, %s8, %s6
  loop: start=0, step=1, limit=4
  $region2: #{basic_conv2d_forward.2} parent=0 // loop_pre_header
    _
  $region3: #{basic_conv2d_forward.2} parent=0 // loop_header
    %s11 = sphi 0, %s15
    %p12 = scmp.ge.s32.totalorder %s11, 4
    %s18 = sphi 0, %s30
    %s19 = sphi 0, %s26
    %s20 = sphi 0, %s18
    %s21 = sphi 0, %s19
    %s22 = sphi 0, %s20
    %s23 = sphi 0, %s21
    %s33 = sphi 0, %s35
    %s36 = sphi 0, %s33
    %s37 = sphi 0, %s36
    %s53 = sphi 0, %s37
    %s57 = sphi 0, %s57
    %s59 = sphi 0, %s57
    %s60 = sphi 0, %s59
    %s74 = sphi 0, %s60
    %s82 = sphi 0, %s84
    %s85 = sphi 0, %s82
    %s86 = sphi 0, %s85
    %s102 = sphi 0, %s86
    %s110 = sphi 0, %s112
    %s113 = sphi 0, %s110
    %s114 = sphi 0, %s113
    %s130 = sphi 0, %s114
    %s138 = sphi 0, %s140
    %s141 = sphi 0, %s138
    %s142 = sphi 0, %s141
    %s158 = sphi 0, %s142
  $region4: #{basic_conv2d_forward.2} parent=0 // loop_header_branch
    %14 = sbr.rel (%p12) target = $region8
  $region5: #{basic_conv2d_forward.2} parent=0 // loop_body
    %s16 = ssub.s32 %s11, 1
    %s17 = ssub.s32 %s11, 2
    %s24 = sadd.s32 1, %s19
    %p25 = scmp.ge.s32.totalorder %s24, 1
    %s26 = scalar_select %p25, 0, %s24
    %s27 = sadd.s32 1, %s18
    %s28 = scalar_select %p25, %s27, %s18
    %p29 = scmp.ge.s32.totalorder %s28, 2
    %s30 = scalar_select %p29, 0, %s28
    %s31 = ssub.s32 %s18, %s30
    %p32 = scmp.eq.s32.totalorder %s31, 0
    %s34 = sadd.s32 %s33, 1
    %s35 = scalar_select %p32, %s33, %s34
    %p38 = pneg %p32
    %p39 = scmp.eq.s32.totalorder %s11, 1
    %p40 = por %p38, %p39
    %p41 = scmp.ne.s32.totalorder %s33, %s36
    %p42 = scmp.eq.s32.totalorder %s11, 0
    %p43 = por %p41, %p42
    %p44 = scmp.ne.s32.totalorder %s33, %s36
    %p45 = scmp.eq.s32.totalorder %s16, 1
    %p46 = por %p44, %p45
    %p47 = scmp.ne.s32.totalorder %s36, %s37
    %p48 = scmp.eq.s32.totalorder %s16, 0
    %p49 = por %p47, %p48
    %p50 = scmp.ne.s32.totalorder %s36, %s37
    %p51 = scmp.eq.s32.totalorder %s17, 1
    %p52 = por %p50, %p51
    %p54 = scmp.ne.s32.totalorder %s37, %s53
    %p55 = scmp.eq.s32.totalorder %s17, 0
    %p56 = por %p54, %p55
    %s58 = sadd.s32 %s57, 1
    %p61 = scmp.eq.s32.totalorder %s11, 1
    %p62 = scmp.ne.s32.totalorder %s57, %s59
    %p63 = scmp.eq.s32.totalorder %s11, 0
    %p64 = por %p62, %p63
    %p65 = scmp.ne.s32.totalorder %s57, %s59
    %p66 = scmp.eq.s32.totalorder %s16, 1
    %p67 = por %p65, %p66
    %p68 = scmp.ne.s32.totalorder %s59, %s60
    %p69 = scmp.eq.s32.totalorder %s16, 0
    %p70 = por %p68, %p69
    %p71 = scmp.ne.s32.totalorder %s59, %s60
    %p72 = scmp.eq.s32.totalorder %s17, 1
    %p73 = por %p71, %p72
    %p75 = scmp.ne.s32.totalorder %s60, %s74
    %p76 = scmp.eq.s32.totalorder %s17, 0
    %p77 = por %p75, %p76
    %s78 = ssub.s32 %s18, %s30
    %s79 = ssub.s32 %s19, %s26
    %s80 = sor.u32 %s78, %s79
    %p81 = scmp.eq.s32.totalorder %s80, 0
    %s83 = sadd.s32 %s82, 1
    %s84 = scalar_select %p81, %s82, %s83
    %p87 = pneg %p81
    %p88 = scmp.eq.s32.totalorder %s11, 1
    %p89 = por %p87, %p88
    %p90 = scmp.ne.s32.totalorder %s82, %s85
    %p91 = scmp.eq.s32.totalorder %s11, 0
    %p92 = por %p90, %p91
    %p93 = scmp.ne.s32.totalorder %s82, %s85
    %p94 = scmp.eq.s32.totalorder %s16, 1
    %p95 = por %p93, %p94
    %p96 = scmp.ne.s32.totalorder %s85, %s86
    %p97 = scmp.eq.s32.totalorder %s16, 0
    %p98 = por %p96, %p97
    %p99 = scmp.ne.s32.totalorder %s85, %s86
    %p100 = scmp.eq.s32.totalorder %s17, 1
    %p101 = por %p99, %p100
    %p103 = scmp.ne.s32.totalorder %s86, %s102
    %p104 = scmp.eq.s32.totalorder %s17, 0
    %p105 = por %p103, %p104
    %s106 = ssub.s32 %s18, %s30
    %s107 = ssub.s32 %s19, %s26
    %s108 = sor.u32 %s106, %s107
    %p109 = scmp.eq.s32.totalorder %s108, 0
    %s111 = sadd.s32 %s110, 1
    %s112 = scalar_select %p109, %s110, %s111
    %p115 = pneg %p109
    %p116 = scmp.eq.s32.totalorder %s11, 1
    %p117 = por %p115, %p116
    %p118 = scmp.ne.s32.totalorder %s110, %s113
    %p119 = scmp.eq.s32.totalorder %s11, 0
    %p120 = por %p118, %p119
    %p121 = scmp.ne.s32.totalorder %s110, %s113
    %p122 = scmp.eq.s32.totalorder %s16, 1
    %p123 = por %p121, %p122
    %p124 = scmp.ne.s32.totalorder %s113, %s114
    %p125 = scmp.eq.s32.totalorder %s16, 0
    %p126 = por %p124, %p125
    %p127 = scmp.ne.s32.totalorder %s113, %s114
    %p128 = scmp.eq.s32.totalorder %s17, 1
    %p129 = por %p127, %p128
    %p131 = scmp.ne.s32.totalorder %s114, %s130
    %p132 = scmp.eq.s32.totalorder %s17, 0
    %p133 = por %p131, %p132
    %s134 = ssub.s32 %s18, %s30
    %s135 = ssub.s32 %s19, %s26
    %s136 = sor.u32 %s134, %s135
    %p137 = scmp.eq.s32.totalorder %s136, 0
    %s139 = sadd.s32 %s138, 1
    %s140 = scalar_select %p137, %s138, %s139
    %p143 = pneg %p137
    %p144 = scmp.eq.s32.totalorder %s11, 1
    %p145 = por %p143, %p144
    %p146 = scmp.ne.s32.totalorder %s138, %s141
    %p147 = scmp.eq.s32.totalorder %s11, 0
    %p148 = por %p146, %p147
    %p149 = scmp.ne.s32.totalorder %s138, %s141
    %p150 = scmp.eq.s32.totalorder %s16, 1
    %p151 = por %p149, %p150
    %p152 = scmp.ne.s32.totalorder %s141, %s142
    %p153 = scmp.eq.s32.totalorder %s16, 0
    %p154 = por %p152, %p153
    %p155 = scmp.ne.s32.totalorder %s141, %s142
    %p156 = scmp.eq.s32.totalorder %s17, 1
    %p157 = por %p155, %p156
    %p159 = scmp.ne.s32.totalorder %s142, %s158
    %p160 = scmp.eq.s32.totalorder %s17, 0
    %p161 = por %p159, %p160
    %p162 = scmp.le.s32.totalorder 1, %s11
    %p163 = scmp.lt.s32.totalorder %s11, 3
    %p164 = pnand %p162, %p163
    %p165 = pneg %p164
    // Predicated region
    $region9: #{basic_conv2d_forward.2} parent=5 // pred_check
      _
    $region10: #{basic_conv2d_forward.2} parent=5 // pred_check_branch
      %167 = sbr.rel (%p164) target = $region12
    $region11: #{basic_conv2d_forward.2} parent=5 // pred_region
      %s168 = ssub.s32 %s11, 1
      // Predicated region
      $region13: #{basic_conv2d_forward.2} parent=11 // pred_check
        %p169 = pneg %p70
      $region14: #{basic_conv2d_forward.2} parent=11 // pred_check_branch
        %171 = sbr.rel (%p169) target = $region16
      $region15: #{basic_conv2d_forward.2} parent=11 // pred_region
        _
      $region16: #{basic_conv2d_forward.2} parent=11 // pred_fallthru
        _
    $region12: #{basic_conv2d_forward.2} parent=5 // pred_fallthru
      _
    %p172 = scmp.lt.s32.totalorder %s11, 2
    // Predicated region
    $region17: #{basic_conv2d_forward.2} parent=5 // pred_check
      %p173 = pneg %p172
    $region18: #{basic_conv2d_forward.2} parent=5 // pred_check_branch
      %175 = sbr.rel (%p173) target = $region20
    $region19: #{basic_conv2d_forward.2} parent=5 // pred_region
      // Predicated region
      $region21: #{basic_conv2d_forward.2} parent=19 // pred_check
        %p176 = pneg %p43
      $region22: #{basic_conv2d_forward.2} parent=19 // pred_check_branch
        %178 = sbr.rel (%p176) target = $region24
      $region23: #{basic_conv2d_forward.2} parent=19 // pred_region
        %p179 = scmp.lt.s32.totalorder %s18, 1
        %s180 = scalar_select %p179, %s18, 1
        %s181 = smul.addr %s180, 54
        %s182 = smul.addr %s181, 4
        %s183 = scalar_lea.vmem %s0, %s182
      $region24: #{basic_conv2d_forward.2} parent=19 // pred_fallthru
        _
    $region20: #{basic_conv2d_forward.2} parent=5 // pred_fallthru
      _
    %p184 = scmp.le.s32.totalorder 1, %s11
    %p185 = scmp.lt.s32.totalorder %s11, 3
    %p186 = pnand %p184, %p185
    %p187 = pneg %p186
    // Predicated region
    $region25: #{basic_conv2d_forward.2} parent=5 // pred_check
      _
    $region26: #{basic_conv2d_forward.2} parent=5 // pred_check_branch
      %189 = sbr.rel (%p186) target = $region28
    $region27: #{basic_conv2d_forward.2} parent=5 // pred_region
      %s190 = ssub.s32 %s11, 1
      %p191 = scmp.lt.s32.totalorder %s20, 1
      %s192 = scalar_select %p191, %s20, 1
      %s193 = smul.addr %s192, 54
      %s194 = smul.addr %s193, 4
      %s195 = scalar_lea.vmem %s0, %s194
      %p196 = pneg %p49
      %p197 = pneg %p46
      %p198 = pneg %p70
      %p199 = pneg %p67
      %p200 = pneg %p98
      %p201 = pneg %p95
      %p202 = scmp.lt.s32.totalorder %s20, 1
      %s203 = scalar_select %p202, %s20, 1
      %p204 = scmp.lt.s32.totalorder %s21, 0
      %s205 = scalar_select %p204, %s21, 0
      %s206 = smul.addr %s205, 2
      %s207 = smul.addr %s203, 16
      %s208 = sadd.s32 %s206, %s207
      %s209 = scalar_lea.vmem %s2, %s208
      %p210 = pneg %p126
      %p211 = pneg %p123
      %p212 = scmp.lt.s32.totalorder %s20, 1
      %s213 = scalar_select %p212, %s20, 1
      %p214 = scmp.lt.s32.totalorder %s21, 0
      %s215 = scalar_select %p214, %s21, 0
      %s216 = sadd.s32 %s215, %s213
      %s217 = scalar_lea.vmem %s3, %s216
      %p218 = pneg %p154
      %p219 = pneg %p151
      %p220 = scmp.lt.s32.totalorder %s20, 1
      %s221 = scalar_select %p220, %s20, 1
      %p222 = scmp.lt.s32.totalorder %s21, 0
      %s223 = scalar_select %p222, %s21, 0
      %s224 = sadd.s32 %s223, %s221
      %s225 = scalar_lea.vmem %s4, %s224
      %p226 = scmp.lt.s32.totalorder %s20, 1
      %s227 = scalar_select %p226, %s20, 1
      %s228 = smul.addr %s227, 54
      %s229 = smul.addr %s228, 4
      %s230 = scalar_lea.vmem %s0, %s229
      %p231 = scmp.lt.s32.totalorder %s20, 1
      %s232 = scalar_select %p231, %s20, 1
      %p233 = scmp.lt.s32.totalorder %s21, 0
      %s234 = scalar_select %p233, %s21, 0
      %s235 = smul.addr %s234, 2
      %s236 = smul.addr %s232, 16
      %s237 = sadd.s32 %s235, %s236
      %s238 = scalar_lea.vmem %s2, %s237
      %p239 = scmp.lt.s32.totalorder %s20, 1
      %s240 = scalar_select %p239, %s20, 1
      %p241 = scmp.lt.s32.totalorder %s21, 0
      %s242 = scalar_select %p241, %s21, 0
      %s243 = sadd.s32 %s242, %s240
      %s244 = scalar_lea.vmem %s3, %s243
      %p245 = scmp.lt.s32.totalorder %s20, 1
      %s246 = scalar_select %p245, %s20, 1
      %p247 = scmp.lt.s32.totalorder %s21, 0
      %s248 = scalar_select %p247, %s21, 0
      %s249 = sadd.s32 %s248, %s246
      %s250 = scalar_lea.vmem %s4, %s249
      %s252 = smul.u32 %s21, 16
      %s253 = smul.u32 %s252, 3
      %s254 = smul.addr %s253, 4
      %s255 = scalar_lea.vmem %s230, %s254
      %v256 = vld [vmem:[%s255] sm:$0xf]
      %v257 = vld [vmem:[%s255 + $0x4] sm:$0xf]
      %v258 = vld [vmem:[%s255 + $0x8] sm:$0x1]
      %v259 = vld [vmem:[%s255 + $0xc] sm:$0xf]
      %v260 = vld [vmem:[%s255 + $0x10] sm:$0xf]
      %v261 = vld [vmem:[%s255 + $0x14] sm:$0x1]
      %v262 = vld [vmem:[%s255 + $0x18] sm:$0xf]
      %v263 = vld [vmem:[%s255 + $0x1c] sm:$0xf]
      %v264 = vld [vmem:[%s255 + $0x20] sm:$0x1]
      %v265 = vld [vmem:[%s255 + $0x24] sm:$0xf]
      %v266 = vld [vmem:[%s255 + $0x28] sm:$0xf]
      %v267 = vld [vmem:[%s255 + $0x2c] sm:$0x1]
      %v268 = vld [vmem:[%s255 + $0x30] sm:$0xf]
      %v269 = vld [vmem:[%s255 + $0x34] sm:$0xf]
      %v270 = vld [vmem:[%s255 + $0x38] sm:$0x1]
      %v271 = vld [vmem:[%s255 + $0x3c] sm:$0xf]
      %v272 = vld [vmem:[%s255 + $0x40] sm:$0xf]
      %v273 = vld [vmem:[%s255 + $0x44] sm:$0x1]
      %v274 = vld [vmem:[%s255 + $0x48] sm:$0xf]
      %v275 = vld [vmem:[%s255 + $0x4c] sm:$0xf]
      %v276 = vld [vmem:[%s255 + $0x50] sm:$0x1]
      %v277 = vld [vmem:[%s255 + $0x54] sm:$0xf]
      %v278 = vld [vmem:[%s255 + $0x58] sm:$0xf]
      %v279 = vld [vmem:[%s255 + $0x5c] sm:$0x1]
      %v280 = vld [vmem:[%s255 + $0x60] sm:$0xf]
      %v281 = vld [vmem:[%s255 + $0x64] sm:$0xf]
      %v282 = vld [vmem:[%s255 + $0x68] sm:$0x1]
      %v283 = vld [vmem:[%s255 + $0x6c] sm:$0xf]
      %v284 = vld [vmem:[%s255 + $0x70] sm:$0xf]
      %v285 = vld [vmem:[%s255 + $0x74] sm:$0x1]
      %v286 = vld [vmem:[%s255 + $0x78] sm:$0xf]
      %v287 = vld [vmem:[%s255 + $0x7c] sm:$0xf]
      %v288 = vld [vmem:[%s255 + $0x80] sm:$0x1]
      %v289 = vld [vmem:[%s255 + $0x84] sm:$0xf]
      %v290 = vld [vmem:[%s255 + $0x88] sm:$0xf]
      %v291 = vld [vmem:[%s255 + $0x8c] sm:$0x1]
      %v292 = vld [vmem:[%s255 + $0x90] sm:$0xf]
      %v293 = vld [vmem:[%s255 + $0x94] sm:$0xf]
      %v294 = vld [vmem:[%s255 + $0x98] sm:$0x1]
      %v295 = vld [vmem:[%s255 + $0x9c] sm:$0xf]
      %v296 = vld [vmem:[%s255 + $0xa0] sm:$0xf]
      %v297 = vld [vmem:[%s255 + $0xa4] sm:$0x1]
      %v298 = vld [vmem:[%s255 + $0xa8] sm:$0xf]
      %v299 = vld [vmem:[%s255 + $0xac] sm:$0xf]
      %v300 = vld [vmem:[%s255 + $0xb0] sm:$0x1]
      %v301 = vld [vmem:[%s255 + $0xb4] sm:$0xf]
      %v302 = vld [vmem:[%s255 + $0xb8] sm:$0xf]
      %v303 = vld [vmem:[%s255 + $0xbc] sm:$0x1]
      %v304 = vld [vmem:[%s255 + $0xc0] sm:$0xf]
      %v305 = vld [vmem:[%s255 + $0xc4] sm:$0xf]
      %v306 = vld [vmem:[%s255 + $0xc8] sm:$0x1]
      %v307 = vld [vmem:[%s255 + $0xcc] sm:$0xf]
      %v308 = vld [vmem:[%s255 + $0xd0] sm:$0xf]
      %v309 = vld [vmem:[%s255 + $0xd4] sm:$0x1]
      %vm310 = vsmask.f32 3328
      %vm311 = vsmask.f32 7440
      %vm312 = vmor %vm310, %vm311
      %v314 = vshrl.u32 %v256, 16
      %v316 = vrot.slane %v314, 4
      %v317 = vshll.u32 %v256, 16
      %v319 = vrot.slane %v317, 5
      %v320 = vor.u32 %v316, %v319
      %v321 = vrot.slane %v320, 4
      %v323 = vshll.u32 %v257, 16
      %v325 = vrot.slane %v323, 5
      %v326 = vsel %vm312, %v321, %v325
      %v327 = vshrl.u32 %v257, 16
      %v329 = vrot.slane %v327, 4
      %v330 = vor.u32 %v329, %v325
      %v331 = vrot.slane %v330, 4
      %v333 = vshll.u32 %v258, 16
      %v335 = vrot.slane %v333, 5
      %v336 = vsel %vm312, %v331, %v335
      %v338 = vshrl.u32 %v259, 16
      %v340 = vrot.slane %v338, 4
      %v341 = vshll.u32 %v259, 16
      %v343 = vrot.slane %v341, 5
      %v344 = vor.u32 %v340, %v343
      %v345 = vrot.slane %v344, 4
      %v347 = vshll.u32 %v260, 16
      %v349 = vrot.slane %v347, 5
      %v350 = vsel %vm312, %v345, %v349
      %v351 = vshrl.u32 %v260, 16
      %v353 = vrot.slane %v351, 4
      %v354 = vor.u32 %v353, %v349
      %v355 = vrot.slane %v354, 4
      %v357 = vshll.u32 %v261, 16
      %v359 = vrot.slane %v357, 5
      %v360 = vsel %vm312, %v355, %v359
      %v362 = vshrl.u32 %v262, 16
      %v364 = vrot.slane %v362, 4
      %v365 = vshll.u32 %v262, 16
      %v367 = vrot.slane %v365, 5
      %v368 = vor.u32 %v364, %v367
      %v369 = vrot.slane %v368, 4
      %v371 = vshll.u32 %v263, 16
      %v373 = vrot.slane %v371, 5
      %v374 = vsel %vm312, %v369, %v373
      %v375 = vshrl.u32 %v263, 16
      %v377 = vrot.slane %v375, 4
      %v378 = vor.u32 %v377, %v373
      %v379 = vrot.slane %v378, 4
      %v381 = vshll.u32 %v264, 16
      %v383 = vrot.slane %v381, 5
      %v384 = vsel %vm312, %v379, %v383
      %v386 = vshrl.u32 %v265, 16
      %v388 = vrot.slane %v386, 4
      %v389 = vshll.u32 %v265, 16
      %v391 = vrot.slane %v389, 5
      %v392 = vor.u32 %v388, %v391
      %v393 = vrot.slane %v392, 4
      %v395 = vshll.u32 %v266, 16
      %v397 = vrot.slane %v395, 5
      %v398 = vsel %vm312, %v393, %v397
      %v399 = vshrl.u32 %v266, 16
      %v401 = vrot.slane %v399, 4
      %v402 = vor.u32 %v401, %v397
      %v403 = vrot.slane %v402, 4
      %v405 = vshll.u32 %v267, 16
      %v407 = vrot.slane %v405, 5
      %v408 = vsel %vm312, %v403, %v407
      %v410 = vshrl.u32 %v268, 16
      %v412 = vrot.slane %v410, 4
      %v413 = vshll.u32 %v268, 16
      %v415 = vrot.slane %v413, 5
      %v416 = vor.u32 %v412, %v415
      %v417 = vrot.slane %v416, 4
      %v419 = vshll.u32 %v269, 16
      %v421 = vrot.slane %v419, 5
      %v422 = vsel %vm312, %v417, %v421
      %v423 = vshrl.u32 %v269, 16
      %v425 = vrot.slane %v423, 4
      %v426 = vor.u32 %v425, %v421
      %v427 = vrot.slane %v426, 4
      %v429 = vshll.u32 %v270, 16
      %v431 = vrot.slane %v429, 5
      %v432 = vsel %vm312, %v427, %v431
      %v434 = vshrl.u32 %v271, 16
      %v436 = vrot.slane %v434, 4
      %v437 = vshll.u32 %v271, 16
      %v439 = vrot.slane %v437, 5
      %v440 = vor.u32 %v436, %v439
      %v441 = vrot.slane %v440, 4
      %v443 = vshll.u32 %v272, 16
      %v445 = vrot.slane %v443, 5
      %v446 = vsel %vm312, %v441, %v445
      %v447 = vshrl.u32 %v272, 16
      %v449 = vrot.slane %v447, 4
      %v450 = vor.u32 %v449, %v445
      %v451 = vrot.slane %v450, 4
      %v453 = vshll.u32 %v273, 16
      %v455 = vrot.slane %v453, 5
      %v456 = vsel %vm312, %v451, %v455
      %v458 = vshrl.u32 %v274, 16
      %v460 = vrot.slane %v458, 4
      %v461 = vshll.u32 %v274, 16
      %v463 = vrot.slane %v461, 5
      %v464 = vor.u32 %v460, %v463
      %v465 = vrot.slane %v464, 4
      %v467 = vshll.u32 %v275, 16
      %v469 = vrot.slane %v467, 5
      %v470 = vsel %vm312, %v465, %v469
      %v471 = vshrl.u32 %v275, 16
      %v473 = vrot.slane %v471, 4
      %v474 = vor.u32 %v473, %v469
      %v475 = vrot.slane %v474, 4
      %v477 = vshll.u32 %v276, 16
      %v479 = vrot.slane %v477, 5
      %v480 = vsel %vm312, %v475, %v479
      %v482 = vshrl.u32 %v277, 16
      %v484 = vrot.slane %v482, 4
      %v485 = vshll.u32 %v277, 16
      %v487 = vrot.slane %v485, 5
      %v488 = vor.u32 %v484, %v487
      %v489 = vrot.slane %v488, 4
      %v491 = vshll.u32 %v278, 16
      %v493 = vrot.slane %v491, 5
      %v494 = vsel %vm312, %v489, %v493
      %v495 = vshrl.u32 %v278, 16
      %v497 = vrot.slane %v495, 4
      %v498 = vor.u32 %v497, %v493
      %v499 = vrot.slane %v498, 4
      %v501 = vshll.u32 %v279, 16
      %v503 = vrot.slane %v501, 5
      %v504 = vsel %vm312, %v499, %v503
      %v506 = vshrl.u32 %v280, 16
      %v508 = vrot.slane %v506, 4
      %v509 = vshll.u32 %v280, 16
      %v511 = vrot.slane %v509, 5
      %v512 = vor.u32 %v508, %v511
      %v513 = vrot.slane %v512, 4
      %v515 = vshll.u32 %v281, 16
      %v517 = vrot.slane %v515, 5
      %v518 = vsel %vm312, %v513, %v517
      %v519 = vshrl.u32 %v281, 16
      %v521 = vrot.slane %v519, 4
      %v522 = vor.u32 %v521, %v517
      %v523 = vrot.slane %v522, 4
      %v525 = vshll.u32 %v282, 16
      %v527 = vrot.slane %v525, 5
      %v528 = vsel %vm312, %v523, %v527
      %v530 = vshrl.u32 %v283, 16
      %v532 = vrot.slane %v530, 4
      %v533 = vshll.u32 %v283, 16
      %v535 = vrot.slane %v533, 5
      %v536 = vor.u32 %v532, %v535
      %v537 = vrot.slane %v536, 4
      %v539 = vshll.u32 %v284, 16
      %v541 = vrot.slane %v539, 5
      %v542 = vsel %vm312, %v537, %v541
      %v543 = vshrl.u32 %v284, 16
      %v545 = vrot.slane %v543, 4
      %v546 = vor.u32 %v545, %v541
      %v547 = vrot.slane %v546, 4
      %v549 = vshll.u32 %v285, 16
      %v551 = vrot.slane %v549, 5
      %v552 = vsel %vm312, %v547, %v551
      %v554 = vshrl.u32 %v286, 16
      %v556 = vrot.slane %v554, 4
      %v557 = vshll.u32 %v286, 16
      %v559 = vrot.slane %v557, 5
      %v560 = vor.u32 %v556, %v559
      %v561 = vrot.slane %v560, 4
      %v563 = vshll.u32 %v287, 16
      %v565 = vrot.slane %v563, 5
      %v566 = vsel %vm312, %v561, %v565
      %v567 = vshrl.u32 %v287, 16
      %v569 = vrot.slane %v567, 4
      %v570 = vor.u32 %v569, %v565
      %v571 = vrot.slane %v570, 4
      %v573 = vshll.u32 %v288, 16
      %v575 = vrot.slane %v573, 5
      %v576 = vsel %vm312, %v571, %v575
      %v578 = vshrl.u32 %v289, 16
      %v580 = vrot.slane %v578, 4
      %v581 = vshll.u32 %v289, 16
      %v583 = vrot.slane %v581, 5
      %v584 = vor.u32 %v580, %v583
      %v585 = vrot.slane %v584, 4
      %v587 = vshll.u32 %v290, 16
      %v589 = vrot.slane %v587, 5
      %v590 = vsel %vm312, %v585, %v589
      %v591 = vshrl.u32 %v290, 16
      %v593 = vrot.slane %v591, 4
      %v594 = vor.u32 %v593, %v589
      %v595 = vrot.slane %v594, 4
      %v597 = vshll.u32 %v291, 16
      %v599 = vrot.slane %v597, 5
      %v600 = vsel %vm312, %v595, %v599
      %v602 = vshrl.u32 %v292, 16
      %v604 = vrot.slane %v602, 4
      %v605 = vshll.u32 %v292, 16
      %v607 = vrot.slane %v605, 5
      %v608 = vor.u32 %v604, %v607
      %v609 = vrot.slane %v608, 4
      %v611 = vshll.u32 %v293, 16
      %v613 = vrot.slane %v611, 5
      %v614 = vsel %vm312, %v609, %v613
      %v615 = vshrl.u32 %v293, 16
      %v617 = vrot.slane %v615, 4
      %v618 = vor.u32 %v617, %v613
      %v619 = vrot.slane %v618, 4
      %v621 = vshll.u32 %v294, 16
      %v623 = vrot.slane %v621, 5
      %v624 = vsel %vm312, %v619, %v623
      %v626 = vshrl.u32 %v295, 16
      %v628 = vrot.slane %v626, 4
      %v629 = vshll.u32 %v295, 16
      %v631 = vrot.slane %v629, 5
      %v632 = vor.u32 %v628, %v631
      %v633 = vrot.slane %v632, 4
      %v635 = vshll.u32 %v296, 16
      %v637 = vrot.slane %v635, 5
      %v638 = vsel %vm312, %v633, %v637
      %v639 = vshrl.u32 %v296, 16
      %v641 = vrot.slane %v639, 4
      %v642 = vor.u32 %v641, %v637
      %v643 = vrot.slane %v642, 4
      %v645 = vshll.u32 %v297, 16
      %v647 = vrot.slane %v645, 5
      %v648 = vsel %vm312, %v643, %v647
      %v650 = vshrl.u32 %v298, 16
      %v652 = vrot.slane %v650, 4
      %v653 = vshll.u32 %v298, 16
      %v655 = vrot.slane %v653, 5
      %v656 = vor.u32 %v652, %v655
      %v657 = vrot.slane %v656, 4
      %v659 = vshll.u32 %v299, 16
      %v661 = vrot.slane %v659, 5
      %v662 = vsel %vm312, %v657, %v661
      %v663 = vshrl.u32 %v299, 16
      %v665 = vrot.slane %v663, 4
      %v666 = vor.u32 %v665, %v661
      %v667 = vrot.slane %v666, 4
      %v669 = vshll.u32 %v300, 16
      %v671 = vrot.slane %v669, 5
      %v672 = vsel %vm312, %v667, %v671
      %v674 = vshrl.u32 %v301, 16
      %v676 = vrot.slane %v674, 4
      %v677 = vshll.u32 %v301, 16
      %v679 = vrot.slane %v677, 5
      %v680 = vor.u32 %v676, %v679
      %v681 = vrot.slane %v680, 4
      %v683 = vshll.u32 %v302, 16
      %v685 = vrot.slane %v683, 5
      %v686 = vsel %vm312, %v681, %v685
      %v687 = vshrl.u32 %v302, 16
      %v689 = vrot.slane %v687, 4
      %v690 = vor.u32 %v689, %v685
      %v691 = vrot.slane %v690, 4
      %v693 = vshll.u32 %v303, 16
      %v695 = vrot.slane %v693, 5
      %v696 = vsel %vm312, %v691, %v695
      %vm745 = vcmask 1042432
      %vm746 = vcmask 1046532
      %vm747 = vmor %vm745, %vm746
      %v748 = vrot.slane %v256, 5
      %v749 = vrot.slane %v748, 4
      %v750 = vrot.slane %v257, 5
      %v751 = vsel %vm747, %v749, %v750
      %v752 = vrot.slane %v750, 4
      %v753 = vrot.slane %v258, 5
      %v754 = vsel %vm747, %v752, %v753
      %v755 = vrot.slane %v259, 5
      %v756 = vrot.slane %v755, 4
      %v757 = vrot.slane %v260, 5
      %v758 = vsel %vm747, %v756, %v757
      %v759 = vrot.slane %v757, 4
      %v760 = vrot.slane %v261, 5
      %v761 = vsel %vm747, %v759, %v760
      %v762 = vrot.slane %v262, 5
      %v763 = vrot.slane %v762, 4
      %v764 = vrot.slane %v263, 5
      %v765 = vsel %vm747, %v763, %v764
      %v766 = vrot.slane %v764, 4
      %v767 = vrot.slane %v264, 5
      %v768 = vsel %vm747, %v766, %v767
      %v769 = vrot.slane %v265, 5
      %v770 = vrot.slane %v769, 4
      %v771 = vrot.slane %v266, 5
      %v772 = vsel %vm747, %v770, %v771
      %v773 = vrot.slane %v771, 4
      %v774 = vrot.slane %v267, 5
      %v775 = vsel %vm747, %v773, %v774
      %v776 = vrot.slane %v268, 5
      %v777 = vrot.slane %v776, 4
      %v778 = vrot.slane %v269, 5
      %v779 = vsel %vm747, %v777, %v778
      %v780 = vrot.slane %v778, 4
      %v781 = vrot.slane %v270, 5
      %v782 = vsel %vm747, %v780, %v781
      %v783 = vrot.slane %v271, 5
      %v784 = vrot.slane %v783, 4
      %v785 = vrot.slane %v272, 5
      %v786 = vsel %vm747, %v784, %v785
      %v787 = vrot.slane %v785, 4
      %v788 = vrot.slane %v273, 5
      %v789 = vsel %vm747, %v787, %v788
      %v790 = vrot.slane %v274, 5
      %v791 = vrot.slane %v790, 4
      %v792 = vrot.slane %v275, 5
      %v793 = vsel %vm747, %v791, %v792
      %v794 = vrot.slane %v792, 4
      %v795 = vrot.slane %v276, 5
      %v796 = vsel %vm747, %v794, %v795
      %v797 = vrot.slane %v277, 5
      %v798 = vrot.slane %v797, 4
      %v799 = vrot.slane %v278, 5
      %v800 = vsel %vm747, %v798, %v799
      %v801 = vrot.slane %v799, 4
      %v802 = vrot.slane %v279, 5
      %v803 = vsel %vm747, %v801, %v802
      %v804 = vrot.slane %v280, 5
      %v805 = vrot.slane %v804, 4
      %v806 = vrot.slane %v281, 5
      %v807 = vsel %vm747, %v805, %v806
      %v808 = vrot.slane %v806, 4
      %v809 = vrot.slane %v282, 5
      %v810 = vsel %vm747, %v808, %v809
      %v811 = vrot.slane %v283, 5
      %v812 = vrot.slane %v811, 4
      %v813 = vrot.slane %v284, 5
      %v814 = vsel %vm747, %v812, %v813
      %v815 = vrot.slane %v813, 4
      %v816 = vrot.slane %v285, 5
      %v817 = vsel %vm747, %v815, %v816
      %v818 = vrot.slane %v286, 5
      %v819 = vrot.slane %v818, 4
      %v820 = vrot.slane %v287, 5
      %v821 = vsel %vm747, %v819, %v820
      %v822 = vrot.slane %v820, 4
      %v823 = vrot.slane %v288, 5
      %v824 = vsel %vm747, %v822, %v823
      %v825 = vrot.slane %v289, 5
      %v826 = vrot.slane %v825, 4
      %v827 = vrot.slane %v290, 5
      %v828 = vsel %vm747, %v826, %v827
      %v829 = vrot.slane %v827, 4
      %v830 = vrot.slane %v291, 5
      %v831 = vsel %vm747, %v829, %v830
      %v832 = vrot.slane %v292, 5
      %v833 = vrot.slane %v832, 4
      %v834 = vrot.slane %v293, 5
      %v835 = vsel %vm747, %v833, %v834
      %v836 = vrot.slane %v834, 4
      %v837 = vrot.slane %v294, 5
      %v838 = vsel %vm747, %v836, %v837
      %v839 = vrot.slane %v295, 5
      %v840 = vrot.slane %v839, 4
      %v841 = vrot.slane %v296, 5
      %v842 = vsel %vm747, %v840, %v841
      %v843 = vrot.slane %v841, 4
      %v844 = vrot.slane %v297, 5
      %v845 = vsel %vm747, %v843, %v844
      %v846 = vrot.slane %v298, 5
      %v847 = vrot.slane %v846, 4
      %v848 = vrot.slane %v299, 5
      %v849 = vsel %vm747, %v847, %v848
      %v850 = vrot.slane %v848, 4
      %v851 = vrot.slane %v300, 5
      %v852 = vsel %vm747, %v850, %v851
      %v853 = vrot.slane %v301, 5
      %v854 = vrot.slane %v853, 4
      %v855 = vrot.slane %v302, 5
      %v856 = vsel %vm747, %v854, %v855
      %v857 = vrot.slane %v855, 4
      %v858 = vrot.slane %v303, 5
      %v859 = vsel %vm747, %v857, %v858
      %v861 = vshrl.u32 %v304, 16
      %v863 = vrot.slane %v861, 4
      %v864 = vshll.u32 %v304, 16
      %v866 = vrot.slane %v864, 5
      %v867 = vor.u32 %v863, %v866
      %v868 = vrot.slane %v867, 4
      %v870 = vshll.u32 %v305, 16
      %v872 = vrot.slane %v870, 5
      %v873 = vsel %vm312, %v868, %v872
      %v874 = vshrl.u32 %v305, 16
      %v876 = vrot.slane %v874, 4
      %v877 = vor.u32 %v876, %v872
      %v878 = vrot.slane %v877, 4
      %v880 = vshll.u32 %v306, 16
      %v882 = vrot.slane %v880, 5
      %v883 = vsel %vm312, %v878, %v882
      %v887 = vrot.slane %v304, 5
      %v888 = vrot.slane %v887, 4
      %v889 = vrot.slane %v305, 5
      %v890 = vsel %vm747, %v888, %v889
      %v891 = vrot.slane %v889, 4
      %v892 = vrot.slane %v306, 5
      %v893 = vsel %vm747, %v891, %v892
      %v895 = vshrl.u32 %v307, 16
      %v897 = vrot.slane %v895, 4
      %v898 = vshll.u32 %v307, 16
      %v900 = vrot.slane %v898, 5
      %v901 = vor.u32 %v897, %v900
      %v902 = vrot.slane %v901, 4
      %v904 = vshll.u32 %v308, 16
      %v906 = vrot.slane %v904, 5
      %v907 = vsel %vm312, %v902, %v906
      %v908 = vshrl.u32 %v308, 16
      %v910 = vrot.slane %v908, 4
      %v911 = vor.u32 %v910, %v906
      %v912 = vrot.slane %v911, 4
      %v914 = vshll.u32 %v309, 16
      %v916 = vrot.slane %v914, 5
      %v917 = vsel %vm312, %v912, %v916
      %v921 = vrot.slane %v307, 5
      %v922 = vrot.slane %v921, 4
      %v923 = vrot.slane %v308, 5
      %v924 = vsel %vm747, %v922, %v923
      %v925 = vrot.slane %v923, 4
      %v926 = vrot.slane %v309, 5
      %v927 = vsel %vm747, %v925, %v926
      %v928 = vunpack.c.l.b16 %v256
      %v929 = vunpack.c.l.b16 %v257
      %v930 = vunpack.c.l.b16 %v259
      %v931 = vunpack.c.l.b16 %v260
      %v932 = vunpack.c.l.b16 %v262
      %v933 = vunpack.c.l.b16 %v263
      %v934 = vunpack.c.l.b16 %v265
      %v935 = vunpack.c.l.b16 %v266
      %v936 = vunpack.c.l.b16 %v268
      %v937 = vunpack.c.l.b16 %v269
      %v938 = vunpack.c.l.b16 %v271
      %v939 = vunpack.c.l.b16 %v272
      %v940 = vunpack.c.l.b16 %v274
      %v941 = vunpack.c.l.b16 %v275
      %v942 = vunpack.c.l.b16 %v277
      %v943 = vunpack.c.l.b16 %v278
      %v944 = vunpack.c.l.b16 %v280
      %v945 = vunpack.c.l.b16 %v281
      %v946 = vunpack.c.l.b16 %v283
      %v947 = vunpack.c.l.b16 %v284
      %v948 = vunpack.c.l.b16 %v286
      %v949 = vunpack.c.l.b16 %v287
      %v950 = vunpack.c.l.b16 %v289
      %v951 = vunpack.c.l.b16 %v290
      %v952 = vunpack.c.l.b16 %v292
      %v953 = vunpack.c.l.b16 %v293
      %v954 = vunpack.c.l.b16 %v295
      %v955 = vunpack.c.l.b16 %v296
      %v956 = vunpack.c.l.b16 %v298
      %v957 = vunpack.c.l.b16 %v299
      %v958 = vunpack.c.l.b16 %v301
      %v959 = vunpack.c.l.b16 %v302
      %v960 = vpack.c.b16 %v929, %v928
      %v961 = vpack.c.b16 %v931, %v930
      %v962 = vpack.c.b16 %v933, %v932
      %v963 = vpack.c.b16 %v935, %v934
      %v964 = vpack.c.b16 %v937, %v936
      %v965 = vpack.c.b16 %v939, %v938
      %v966 = vpack.c.b16 %v941, %v940
      %v967 = vpack.c.b16 %v943, %v942
      %v968 = vpack.c.b16 %v945, %v944
      %v969 = vpack.c.b16 %v947, %v946
      %v970 = vpack.c.b16 %v949, %v948
      %v971 = vpack.c.b16 %v951, %v950
      %v972 = vpack.c.b16 %v953, %v952
      %v973 = vpack.c.b16 %v955, %v954
      %v974 = vpack.c.b16 %v957, %v956
      %v975 = vpack.c.b16 %v959, %v958
      %v976 = vunpack.c.l.b16 %v326
      %v977 = vunpack.c.l.b16 %v336
      %v978 = vunpack.c.l.b16 %v350
      %v979 = vunpack.c.l.b16 %v360
      %v980 = vunpack.c.l.b16 %v374
      %v981 = vunpack.c.l.b16 %v384
      %v982 = vunpack.c.l.b16 %v398
      %v983 = vunpack.c.l.b16 %v408
      %v984 = vunpack.c.l.b16 %v422
      %v985 = vunpack.c.l.b16 %v432
      %v986 = vunpack.c.l.b16 %v446
      %v987 = vunpack.c.l.b16 %v456
      %v988 = vunpack.c.l.b16 %v470
      %v989 = vunpack.c.l.b16 %v480
      %v990 = vunpack.c.l.b16 %v494
      %v991 = vunpack.c.l.b16 %v504
      %v992 = vunpack.c.l.b16 %v518
      %v993 = vunpack.c.l.b16 %v528
      %v994 = vunpack.c.l.b16 %v542
      %v995 = vunpack.c.l.b16 %v552
      %v996 = vunpack.c.l.b16 %v566
      %v997 = vunpack.c.l.b16 %v576
      %v998 = vunpack.c.l.b16 %v590
      %v999 = vunpack.c.l.b16 %v600
      %v1000 = vunpack.c.l.b16 %v614
      %v1001 = vunpack.c.l.b16 %v624
      %v1002 = vunpack.c.l.b16 %v638
      %v1003 = vunpack.c.l.b16 %v648
      %v1004 = vunpack.c.l.b16 %v662
      %v1005 = vunpack.c.l.b16 %v672
      %v1006 = vunpack.c.l.b16 %v686
      %v1007 = vunpack.c.l.b16 %v696
      %v1008 = vpack.c.b16 %v977, %v976
      %v1009 = vpack.c.b16 %v979, %v978
      %v1010 = vpack.c.b16 %v981, %v980
      %v1011 = vpack.c.b16 %v983, %v982
      %v1012 = vpack.c.b16 %v985, %v984
      %v1013 = vpack.c.b16 %v987, %v986
      %v1014 = vpack.c.b16 %v989, %v988
      %v1015 = vpack.c.b16 %v991, %v990
      %v1016 = vpack.c.b16 %v993, %v992
      %v1017 = vpack.c.b16 %v995, %v994
      %v1018 = vpack.c.b16 %v997, %v996
      %v1019 = vpack.c.b16 %v999, %v998
      %v1020 = vpack.c.b16 %v1001, %v1000
      %v1021 = vpack.c.b16 %v1003, %v1002
      %v1022 = vpack.c.b16 %v1005, %v1004
      %v1023 = vpack.c.b16 %v1007, %v1006
      %1024 = vrot.lane.b32.xlu0 %v1008, 4
      %v1025 = vpop.permute.xlu0 %1024
      %1026 = vrot.lane.b32.xlu0 %v1009, 4
      %v1027 = vpop.permute.xlu0 %1026
      %1028 = vrot.lane.b32.xlu0 %v1010, 4
      %v1029 = vpop.permute.xlu0 %1028
      %1030 = vrot.lane.b32.xlu0 %v1011, 4
      %v1031 = vpop.permute.xlu0 %1030
      %1032 = vrot.lane.b32.xlu0 %v1012, 4
      %v1033 = vpop.permute.xlu0 %1032
      %1034 = vrot.lane.b32.xlu0 %v1013, 4
      %v1035 = vpop.permute.xlu0 %1034
      %1036 = vrot.lane.b32.xlu0 %v1014, 4
      %v1037 = vpop.permute.xlu0 %1036
      %1038 = vrot.lane.b32.xlu0 %v1015, 4
      %v1039 = vpop.permute.xlu0 %1038
      %1040 = vrot.lane.b32.xlu0 %v1016, 4
      %v1041 = vpop.permute.xlu0 %1040
      %1042 = vrot.lane.b32.xlu0 %v1017, 4
      %v1043 = vpop.permute.xlu0 %1042
      %1044 = vrot.lane.b32.xlu0 %v1018, 4
      %v1045 = vpop.permute.xlu0 %1044
      %1046 = vrot.lane.b32.xlu0 %v1019, 4
      %v1047 = vpop.permute.xlu0 %1046
      %1048 = vrot.lane.b32.xlu0 %v1020, 4
      %v1049 = vpop.permute.xlu0 %1048
      %1050 = vrot.lane.b32.xlu0 %v1021, 4
      %v1051 = vpop.permute.xlu0 %1050
      %1052 = vrot.lane.b32.xlu0 %v1022, 4
      %v1053 = vpop.permute.xlu0 %1052
      %1054 = vrot.lane.b32.xlu0 %v1023, 4
      %v1055 = vpop.permute.xlu0 %1054
      %v1056 = vunpack.c.l.b16 %v751
      %v1057 = vunpack.c.l.b16 %v754
      %v1058 = vunpack.c.l.b16 %v758
      %v1059 = vunpack.c.l.b16 %v761
      %v1060 = vunpack.c.l.b16 %v765
      %v1061 = vunpack.c.l.b16 %v768
      %v1062 = vunpack.c.l.b16 %v772
      %v1063 = vunpack.c.l.b16 %v775
      %v1064 = vunpack.c.l.b16 %v779
      %v1065 = vunpack.c.l.b16 %v782
      %v1066 = vunpack.c.l.b16 %v786
      %v1067 = vunpack.c.l.b16 %v789
      %v1068 = vunpack.c.l.b16 %v793
      %v1069 = vunpack.c.l.b16 %v796
      %v1070 = vunpack.c.l.b16 %v800
      %v1071 = vunpack.c.l.b16 %v803
      %v1072 = vunpack.c.l.b16 %v807
      %v1073 = vunpack.c.l.b16 %v810
      %v1074 = vunpack.c.l.b16 %v814
      %v1075 = vunpack.c.l.b16 %v817
      %v1076 = vunpack.c.l.b16 %v821
      %v1077 = vunpack.c.l.b16 %v824
      %v1078 = vunpack.c.l.b16 %v828
      %v1079 = vunpack.c.l.b16 %v831
      %v1080 = vunpack.c.l.b16 %v835
      %v1081 = vunpack.c.l.b16 %v838
      %v1082 = vunpack.c.l.b16 %v842
      %v1083 = vunpack.c.l.b16 %v845
      %v1084 = vunpack.c.l.b16 %v849
      %v1085 = vunpack.c.l.b16 %v852
      %v1086 = vunpack.c.l.b16 %v856
      %v1087 = vunpack.c.l.b16 %v859
      %v1088 = vpack.c.b16 %v1057, %v1056
      %v1089 = vpack.c.b16 %v1059, %v1058
      %v1090 = vpack.c.b16 %v1061, %v1060
      %v1091 = vpack.c.b16 %v1063, %v1062
      %v1092 = vpack.c.b16 %v1065, %v1064
      %v1093 = vpack.c.b16 %v1067, %v1066
      %v1094 = vpack.c.b16 %v1069, %v1068
      %v1095 = vpack.c.b16 %v1071, %v1070
      %v1096 = vpack.c.b16 %v1073, %v1072
      %v1097 = vpack.c.b16 %v1075, %v1074
      %v1098 = vpack.c.b16 %v1077, %v1076
      %v1099 = vpack.c.b16 %v1079, %v1078
      %v1100 = vpack.c.b16 %v1081, %v1080
      %v1101 = vpack.c.b16 %v1083, %v1082
      %v1102 = vpack.c.b16 %v1085, %v1084
      %v1103 = vpack.c.b16 %v1087, %v1086
      %1104 = vrot.lane.b32.xlu0 %v1088, 8
      %v1105 = vpop.permute.xlu0 %1104
      %1106 = vrot.lane.b32.xlu0 %v1089, 8
      %v1107 = vpop.permute.xlu0 %1106
      %1108 = vrot.lane.b32.xlu0 %v1090, 8
      %v1109 = vpop.permute.xlu0 %1108
      %1110 = vrot.lane.b32.xlu0 %v1091, 8
      %v1111 = vpop.permute.xlu0 %1110
      %1112 = vrot.lane.b32.xlu0 %v1092, 8
      %v1113 = vpop.permute.xlu0 %1112
      %1114 = vrot.lane.b32.xlu0 %v1093, 8
      %v1115 = vpop.permute.xlu0 %1114
      %1116 = vrot.lane.b32.xlu0 %v1094, 8
      %v1117 = vpop.permute.xlu0 %1116
      %1118 = vrot.lane.b32.xlu0 %v1095, 8
      %v1119 = vpop.permute.xlu0 %1118
      %1120 = vrot.lane.b32.xlu0 %v1096, 8
      %v1121 = vpop.permute.xlu0 %1120
      %1122 = vrot.lane.b32.xlu0 %v1097, 8
      %v1123 = vpop.permute.xlu0 %1122
      %1124 = vrot.lane.b32.xlu0 %v1098, 8
      %v1125 = vpop.permute.xlu0 %1124
      %1126 = vrot.lane.b32.xlu0 %v1099, 8
      %v1127 = vpop.permute.xlu0 %1126
      %1128 = vrot.lane.b32.xlu0 %v1100, 8
      %v1129 = vpop.permute.xlu0 %1128
      %1130 = vrot.lane.b32.xlu0 %v1101, 8
      %v1131 = vpop.permute.xlu0 %1130
      %1132 = vrot.lane.b32.xlu0 %v1102, 8
      %v1133 = vpop.permute.xlu0 %1132
      %1134 = vrot.lane.b32.xlu0 %v1103, 8
      %v1135 = vpop.permute.xlu0 %1134
      %v1136 = vunpack.c.l.b16 %v304
      %v1137 = vunpack.c.l.b16 %v305
      %v1138 = vpack.c.b16 %v1137, %v1136
      %1139 = vrot.lane.b32.xlu0 %v961, 12
      %v1140 = vpop.permute.xlu0 %1139
      %1141 = vrot.lane.b32.xlu0 %v962, 12
      %v1142 = vpop.permute.xlu0 %1141
      %1143 = vrot.lane.b32.xlu0 %v963, 12
      %v1144 = vpop.permute.xlu0 %1143
      %1145 = vrot.lane.b32.xlu0 %v964, 12
      %v1146 = vpop.permute.xlu0 %1145
      %1147 = vrot.lane.b32.xlu0 %v965, 12
      %v1148 = vpop.permute.xlu0 %1147
      %1149 = vrot.lane.b32.xlu0 %v966, 12
      %v1150 = vpop.permute.xlu0 %1149
      %1151 = vrot.lane.b32.xlu0 %v967, 12
      %v1152 = vpop.permute.xlu0 %1151
      %1153 = vrot.lane.b32.xlu0 %v968, 12
      %v1154 = vpop.permute.xlu0 %1153
      %1155 = vrot.lane.b32.xlu0 %v969, 12
      %v1156 = vpop.permute.xlu0 %1155
      %1157 = vrot.lane.b32.xlu0 %v970, 12
      %v1158 = vpop.permute.xlu0 %1157
      %1159 = vrot.lane.b32.xlu0 %v971, 12
      %v1160 = vpop.permute.xlu0 %1159
      %1161 = vrot.lane.b32.xlu0 %v972, 12
      %v1162 = vpop.permute.xlu0 %1161
      %1163 = vrot.lane.b32.xlu0 %v973, 12
      %v1164 = vpop.permute.xlu0 %1163
      %1165 = vrot.lane.b32.xlu0 %v974, 12
      %v1166 = vpop.permute.xlu0 %1165
      %1167 = vrot.lane.b32.xlu0 %v975, 12
      %v1168 = vpop.permute.xlu0 %1167
      %1169 = vrot.lane.b32.xlu0 %v1138, 12
      %v1170 = vpop.permute.xlu0 %1169
      %v1171 = vunpack.c.l.b16 %v873
      %v1172 = vunpack.c.l.b16 %v883
      %v1173 = vpack.c.b16 %v1172, %v1171
      %1174 = vrot.lane.b32.xlu0 %v1009, 16
      %v1175 = vpop.permute.xlu0 %1174
      %1176 = vrot.lane.b32.xlu0 %v1010, 16
      %v1177 = vpop.permute.xlu0 %1176
      %1178 = vrot.lane.b32.xlu0 %v1011, 16
      %v1179 = vpop.permute.xlu0 %1178
      %1180 = vrot.lane.b32.xlu0 %v1012, 16
      %v1181 = vpop.permute.xlu0 %1180
      %1182 = vrot.lane.b32.xlu0 %v1013, 16
      %v1183 = vpop.permute.xlu0 %1182
      %1184 = vrot.lane.b32.xlu0 %v1014, 16
      %v1185 = vpop.permute.xlu0 %1184
      %1186 = vrot.lane.b32.xlu0 %v1015, 16
      %v1187 = vpop.permute.xlu0 %1186
      %1188 = vrot.lane.b32.xlu0 %v1016, 16
      %v1189 = vpop.permute.xlu0 %1188
      %1190 = vrot.lane.b32.xlu0 %v1017, 16
      %v1191 = vpop.permute.xlu0 %1190
      %1192 = vrot.lane.b32.xlu0 %v1018, 16
      %v1193 = vpop.permute.xlu0 %1192
      %1194 = vrot.lane.b32.xlu0 %v1019, 16
      %v1195 = vpop.permute.xlu0 %1194
      %1196 = vrot.lane.b32.xlu0 %v1020, 16
      %v1197 = vpop.permute.xlu0 %1196
      %1198 = vrot.lane.b32.xlu0 %v1021, 16
      %v1199 = vpop.permute.xlu0 %1198
      %1200 = vrot.lane.b32.xlu0 %v1022, 16
      %v1201 = vpop.permute.xlu0 %1200
      %1202 = vrot.lane.b32.xlu0 %v1023, 16
      %v1203 = vpop.permute.xlu0 %1202
      %1204 = vrot.lane.b32.xlu0 %v1173, 16
      %v1205 = vpop.permute.xlu0 %1204
      %v1206 = vunpack.c.l.b16 %v890
      %v1207 = vunpack.c.l.b16 %v893
      %v1208 = vpack.c.b16 %v1207, %v1206
      %1209 = vrot.lane.b32.xlu0 %v1089, 20
      %v1210 = vpop.permute.xlu0 %1209
      %1211 = vrot.lane.b32.xlu0 %v1090, 20
      %v1212 = vpop.permute.xlu0 %1211
      %1213 = vrot.lane.b32.xlu0 %v1091, 20
      %v1214 = vpop.permute.xlu0 %1213
      %1215 = vrot.lane.b32.xlu0 %v1092, 20
      %v1216 = vpop.permute.xlu0 %1215
      %1217 = vrot.lane.b32.xlu0 %v1093, 20
      %v1218 = vpop.permute.xlu0 %1217
      %1219 = vrot.lane.b32.xlu0 %v1094, 20
      %v1220 = vpop.permute.xlu0 %1219
      %1221 = vrot.lane.b32.xlu0 %v1095, 20
      %v1222 = vpop.permute.xlu0 %1221
      %1223 = vrot.lane.b32.xlu0 %v1096, 20
      %v1224 = vpop.permute.xlu0 %1223
      %1225 = vrot.lane.b32.xlu0 %v1097, 20
      %v1226 = vpop.permute.xlu0 %1225
      %1227 = vrot.lane.b32.xlu0 %v1098, 20
      %v1228 = vpop.permute.xlu0 %1227
      %1229 = vrot.lane.b32.xlu0 %v1099, 20
      %v1230 = vpop.permute.xlu0 %1229
      %1231 = vrot.lane.b32.xlu0 %v1100, 20
      %v1232 = vpop.permute.xlu0 %1231
      %1233 = vrot.lane.b32.xlu0 %v1101, 20
      %v1234 = vpop.permute.xlu0 %1233
      %1235 = vrot.lane.b32.xlu0 %v1102, 20
      %v1236 = vpop.permute.xlu0 %1235
      %1237 = vrot.lane.b32.xlu0 %v1103, 20
      %v1238 = vpop.permute.xlu0 %1237
      %1239 = vrot.lane.b32.xlu0 %v1208, 20
      %v1240 = vpop.permute.xlu0 %1239
      %v1241 = vunpack.c.l.b16 %v307
      %v1242 = vunpack.c.l.b16 %v308
      %v1243 = vpack.c.b16 %v1242, %v1241
      %1244 = vrot.lane.b32.xlu0 %v962, 24
      %v1245 = vpop.permute.xlu0 %1244
      %1246 = vrot.lane.b32.xlu0 %v963, 24
      %v1247 = vpop.permute.xlu0 %1246
      %1248 = vrot.lane.b32.xlu0 %v964, 24
      %v1249 = vpop.permute.xlu0 %1248
      %1250 = vrot.lane.b32.xlu0 %v965, 24
      %v1251 = vpop.permute.xlu0 %1250
      %1252 = vrot.lane.b32.xlu0 %v966, 24
      %v1253 = vpop.permute.xlu0 %1252
      %1254 = vrot.lane.b32.xlu0 %v967, 24
      %v1255 = vpop.permute.xlu0 %1254
      %1256 = vrot.lane.b32.xlu0 %v968, 24
      %v1257 = vpop.permute.xlu0 %1256
      %1258 = vrot.lane.b32.xlu0 %v969, 24
      %v1259 = vpop.permute.xlu0 %1258
      %1260 = vrot.lane.b32.xlu0 %v970, 24
      %v1261 = vpop.permute.xlu0 %1260
      %1262 = vrot.lane.b32.xlu0 %v971, 24
      %v1263 = vpop.permute.xlu0 %1262
      %1264 = vrot.lane.b32.xlu0 %v972, 24
      %v1265 = vpop.permute.xlu0 %1264
      %1266 = vrot.lane.b32.xlu0 %v973, 24
      %v1267 = vpop.permute.xlu0 %1266
      %1268 = vrot.lane.b32.xlu0 %v974, 24
      %v1269 = vpop.permute.xlu0 %1268
      %1270 = vrot.lane.b32.xlu0 %v975, 24
      %v1271 = vpop.permute.xlu0 %1270
      %1272 = vrot.lane.b32.xlu0 %v1138, 24
      %v1273 = vpop.permute.xlu0 %1272
      %1274 = vrot.lane.b32.xlu0 %v1243, 24
      %v1275 = vpop.permute.xlu0 %1274
      %v1276 = vunpack.c.l.b16 %v907
      %v1277 = vunpack.c.l.b16 %v917
      %v1278 = vpack.c.b16 %v1277, %v1276
      %1279 = vrot.lane.b32.xlu0 %v1010, 28
      %v1280 = vpop.permute.xlu0 %1279
      %1281 = vrot.lane.b32.xlu0 %v1011, 28
      %v1282 = vpop.permute.xlu0 %1281
      %1283 = vrot.lane.b32.xlu0 %v1012, 28
      %v1284 = vpop.permute.xlu0 %1283
      %1285 = vrot.lane.b32.xlu0 %v1013, 28
      %v1286 = vpop.permute.xlu0 %1285
      %1287 = vrot.lane.b32.xlu0 %v1014, 28
      %v1288 = vpop.permute.xlu0 %1287
      %1289 = vrot.lane.b32.xlu0 %v1015, 28
      %v1290 = vpop.permute.xlu0 %1289
      %1291 = vrot.lane.b32.xlu0 %v1016, 28
      %v1292 = vpop.permute.xlu0 %1291
      %1293 = vrot.lane.b32.xlu0 %v1017, 28
      %v1294 = vpop.permute.xlu0 %1293
      %1295 = vrot.lane.b32.xlu0 %v1018, 28
      %v1296 = vpop.permute.xlu0 %1295
      %1297 = vrot.lane.b32.xlu0 %v1019, 28
      %v1298 = vpop.permute.xlu0 %1297
      %1299 = vrot.lane.b32.xlu0 %v1020, 28
      %v1300 = vpop.permute.xlu0 %1299
      %1301 = vrot.lane.b32.xlu0 %v1021, 28
      %v1302 = vpop.permute.xlu0 %1301
      %1303 = vrot.lane.b32.xlu0 %v1022, 28
      %v1304 = vpop.permute.xlu0 %1303
      %1305 = vrot.lane.b32.xlu0 %v1023, 28
      %v1306 = vpop.permute.xlu0 %1305
      %1307 = vrot.lane.b32.xlu0 %v1173, 28
      %v1308 = vpop.permute.xlu0 %1307
      %1309 = vrot.lane.b32.xlu0 %v1278, 28
      %v1310 = vpop.permute.xlu0 %1309
      %v1311 = vunpack.c.l.b16 %v924
      %v1312 = vunpack.c.l.b16 %v927
      %v1313 = vpack.c.b16 %v1312, %v1311
      %1314 = vrot.lane.b32.xlu0 %v1090, 32
      %v1315 = vpop.permute.xlu0 %1314
      %1316 = vrot.lane.b32.xlu0 %v1091, 32
      %v1317 = vpop.permute.xlu0 %1316
      %1318 = vrot.lane.b32.xlu0 %v1092, 32
      %v1319 = vpop.permute.xlu0 %1318
      %1320 = vrot.lane.b32.xlu0 %v1093, 32
      %v1321 = vpop.permute.xlu0 %1320
      %1322 = vrot.lane.b32.xlu0 %v1094, 32
      %v1323 = vpop.permute.xlu0 %1322
      %1324 = vrot.lane.b32.xlu0 %v1095, 32
      %v1325 = vpop.permute.xlu0 %1324
      %1326 = vrot.lane.b32.xlu0 %v1096, 32
      %v1327 = vpop.permute.xlu0 %1326
      %1328 = vrot.lane.b32.xlu0 %v1097, 32
      %v1329 = vpop.permute.xlu0 %1328
      %1330 = vrot.lane.b32.xlu0 %v1098, 32
      %v1331 = vpop.permute.xlu0 %1330
      %1332 = vrot.lane.b32.xlu0 %v1099, 32
      %v1333 = vpop.permute.xlu0 %1332
      %1334 = vrot.lane.b32.xlu0 %v1100, 32
      %v1335 = vpop.permute.xlu0 %1334
      %1336 = vrot.lane.b32.xlu0 %v1101, 32
      %v1337 = vpop.permute.xlu0 %1336
      %1338 = vrot.lane.b32.xlu0 %v1102, 32
      %v1339 = vpop.permute.xlu0 %1338
      %1340 = vrot.lane.b32.xlu0 %v1103, 32
      %v1341 = vpop.permute.xlu0 %1340
      %1342 = vrot.lane.b32.xlu0 %v1208, 32
      %v1343 = vpop.permute.xlu0 %1342
      %1344 = vrot.lane.b32.xlu0 %v1313, 32
      %v1345 = vpop.permute.xlu0 %1344
      %vm1346 = vcmask 31744
      %v1349 = vsel %vm1346, %v960, %v1025
      %v1352 = vsel %vm1346, %v961, %v1027
      %v1355 = vsel %vm1346, %v962, %v1029
      %v1358 = vsel %vm1346, %v963, %v1031
      %v1361 = vsel %vm1346, %v964, %v1033
      %v1364 = vsel %vm1346, %v965, %v1035
      %v1367 = vsel %vm1346, %v966, %v1037
      %v1370 = vsel %vm1346, %v967, %v1039
      %v1373 = vsel %vm1346, %v968, %v1041
      %v1376 = vsel %vm1346, %v969, %v1043
      %v1379 = vsel %vm1346, %v970, %v1045
      %v1382 = vsel %vm1346, %v971, %v1047
      %v1385 = vsel %vm1346, %v972, %v1049
      %v1388 = vsel %vm1346, %v973, %v1051
      %v1391 = vsel %vm1346, %v974, %v1053
      %v1394 = vsel %vm1346, %v975, %v1055
      %vm1395 = vcmask 64512
      %v1397 = vsel %vm1395, %v1349, %v1105
      %v1399 = vsel %vm1395, %v1352, %v1107
      %v1401 = vsel %vm1395, %v1355, %v1109
      %v1403 = vsel %vm1395, %v1358, %v1111
      %v1405 = vsel %vm1395, %v1361, %v1113
      %v1407 = vsel %vm1395, %v1364, %v1115
      %v1409 = vsel %vm1395, %v1367, %v1117
      %v1411 = vsel %vm1395, %v1370, %v1119
      %v1413 = vsel %vm1395, %v1373, %v1121
      %v1415 = vsel %vm1395, %v1376, %v1123
      %v1417 = vsel %vm1395, %v1379, %v1125
      %v1419 = vsel %vm1395, %v1382, %v1127
      %v1421 = vsel %vm1395, %v1385, %v1129
      %v1423 = vsel %vm1395, %v1388, %v1131
      %v1425 = vsel %vm1395, %v1391, %v1133
      %v1427 = vsel %vm1395, %v1394, %v1135
      %vm1428 = vcmask 97280
      %v1430 = vsel %vm1428, %v1397, %v1140
      %v1432 = vsel %vm1428, %v1399, %v1142
      %v1434 = vsel %vm1428, %v1401, %v1144
      %v1436 = vsel %vm1428, %v1403, %v1146
      %v1438 = vsel %vm1428, %v1405, %v1148
      %v1440 = vsel %vm1428, %v1407, %v1150
      %v1442 = vsel %vm1428, %v1409, %v1152
      %v1444 = vsel %vm1428, %v1411, %v1154
      %v1446 = vsel %vm1428, %v1413, %v1156
      %v1448 = vsel %vm1428, %v1415, %v1158
      %v1450 = vsel %vm1428, %v1417, %v1160
      %v1452 = vsel %vm1428, %v1419, %v1162
      %v1454 = vsel %vm1428, %v1421, %v1164
      %v1456 = vsel %vm1428, %v1423, %v1166
      %v1458 = vsel %vm1428, %v1425, %v1168
      %v1460 = vsel %vm1428, %v1427, %v1170
      %vm1461 = vcmask 130048
      %v1463 = vsel %vm1461, %v1430, %v1175
      %v1465 = vsel %vm1461, %v1432, %v1177
      %v1467 = vsel %vm1461, %v1434, %v1179
      %v1469 = vsel %vm1461, %v1436, %v1181
      %v1471 = vsel %vm1461, %v1438, %v1183
      %v1473 = vsel %vm1461, %v1440, %v1185
      %v1475 = vsel %vm1461, %v1442, %v1187
      %v1477 = vsel %vm1461, %v1444, %v1189
      %v1479 = vsel %vm1461, %v1446, %v1191
      %v1481 = vsel %vm1461, %v1448, %v1193
      %v1483 = vsel %vm1461, %v1450, %v1195
      %v1485 = vsel %vm1461, %v1452, %v1197
      %v1487 = vsel %vm1461, %v1454, %v1199
      %v1489 = vsel %vm1461, %v1456, %v1201
      %v1491 = vsel %vm1461, %v1458, %v1203
      %v1493 = vsel %vm1461, %v1460, %v1205
      %vm1494 = vcmask 162816
      %v1496 = vsel %vm1494, %v1463, %v1210
      %v1498 = vsel %vm1494, %v1465, %v1212
      %v1500 = vsel %vm1494, %v1467, %v1214
      %v1502 = vsel %vm1494, %v1469, %v1216
      %v1504 = vsel %vm1494, %v1471, %v1218
      %v1506 = vsel %vm1494, %v1473, %v1220
      %v1508 = vsel %vm1494, %v1475, %v1222
      %v1510 = vsel %vm1494, %v1477, %v1224
      %v1512 = vsel %vm1494, %v1479, %v1226
      %v1514 = vsel %vm1494, %v1481, %v1228
      %v1516 = vsel %vm1494, %v1483, %v1230
      %v1518 = vsel %vm1494, %v1485, %v1232
      %v1520 = vsel %vm1494, %v1487, %v1234
      %v1522 = vsel %vm1494, %v1489, %v1236
      %v1524 = vsel %vm1494, %v1491, %v1238
      %v1526 = vsel %vm1494, %v1493, %v1240
      %vm1527 = vcmask 195584
      %v1529 = vsel %vm1527, %v1496, %v1245
      %v1531 = vsel %vm1527, %v1498, %v1247
      %v1533 = vsel %vm1527, %v1500, %v1249
      %v1535 = vsel %vm1527, %v1502, %v1251
      %v1537 = vsel %vm1527, %v1504, %v1253
      %v1539 = vsel %vm1527, %v1506, %v1255
      %v1541 = vsel %vm1527, %v1508, %v1257
      %v1543 = vsel %vm1527, %v1510, %v1259
      %v1545 = vsel %vm1527, %v1512, %v1261
      %v1547 = vsel %vm1527, %v1514, %v1263
      %v1549 = vsel %vm1527, %v1516, %v1265
      %v1551 = vsel %vm1527, %v1518, %v1267
      %v1553 = vsel %vm1527, %v1520, %v1269
      %v1555 = vsel %vm1527, %v1522, %v1271
      %v1557 = vsel %vm1527, %v1524, %v1273
      %v1559 = vsel %vm1527, %v1526, %v1275
      %vm1560 = vcmask 228352
      %v1562 = vsel %vm1560, %v1529, %v1280
      %v1564 = vsel %vm1560, %v1531, %v1282
      %v1566 = vsel %vm1560, %v1533, %v1284
      %v1568 = vsel %vm1560, %v1535, %v1286
      %v1570 = vsel %vm1560, %v1537, %v1288
      %v1572 = vsel %vm1560, %v1539, %v1290
      %v1574 = vsel %vm1560, %v1541, %v1292
      %v1576 = vsel %vm1560, %v1543, %v1294
      %v1578 = vsel %vm1560, %v1545, %v1296
      %v1580 = vsel %vm1560, %v1547, %v1298
      %v1582 = vsel %vm1560, %v1549, %v1300
      %v1584 = vsel %vm1560, %v1551, %v1302
      %v1586 = vsel %vm1560, %v1553, %v1304
      %v1588 = vsel %vm1560, %v1555, %v1306
      %v1590 = vsel %vm1560, %v1557, %v1308
      %v1592 = vsel %vm1560, %v1559, %v1310
      %vm1593 = vcmask 261120
      %v1595 = vsel %vm1593, %v1562, %v1315
      %v1597 = vsel %vm1593, %v1564, %v1317
      %v1599 = vsel %vm1593, %v1566, %v1319
      %v1601 = vsel %vm1593, %v1568, %v1321
      %v1603 = vsel %vm1593, %v1570, %v1323
      %v1605 = vsel %vm1593, %v1572, %v1325
      %v1607 = vsel %vm1593, %v1574, %v1327
      %v1609 = vsel %vm1593, %v1576, %v1329
      %v1611 = vsel %vm1593, %v1578, %v1331
      %v1613 = vsel %vm1593, %v1580, %v1333
      %v1615 = vsel %vm1593, %v1582, %v1335
      %v1617 = vsel %vm1593, %v1584, %v1337
      %v1619 = vsel %vm1593, %v1586, %v1339
      %v1621 = vsel %vm1593, %v1588, %v1341
      %v1623 = vsel %vm1593, %v1590, %v1343
      %v1625 = vsel %vm1593, %v1592, %v1345
      %v1626 = vld [vmem:[%s1] sm:$0xf]
      %v1627 = vld [vmem:[%s1 + $0x4] sm:$0xf]
      %v1628 = vld [vmem:[%s1 + $0x8] sm:$0xf]
      %v1629 = vld [vmem:[%s1 + $0xc] sm:$0xf]
      %v1630 = vld [vmem:[%s1 + $0x10] sm:$0x3]
      %v1636 = vunpack.c.l.b16 %v1626
      %v1637 = vunpack.c.l.b16 %v1627
      %v1638 = vunpack.c.l.b16 %v1628
      %v1639 = vunpack.c.l.b16 %v1629
      %v1640 = vunpack.c.l.b16 %v1630
      %v1641 = vpack.c.b16 %v1637, %v1636
      %v1642 = vpack.c.b16 %v1639, %v1638
      %v1643 = vpack.c.b16 %v1640, %v1640
      %vm1646 = vcmask 293888
      %v1647 = vsel %vm1646, %v1595, 0
      %v1649 = vsel %vm1646, %v1597, 0
      %v1651 = vsel %vm1646, %v1599, 0
      %v1653 = vsel %vm1646, %v1601, 0
      %v1655 = vsel %vm1646, %v1603, 0
      %v1657 = vsel %vm1646, %v1605, 0
      %v1659 = vsel %vm1646, %v1607, 0
      %v1661 = vsel %vm1646, %v1609, 0
      %v1663 = vsel %vm1646, %v1611, 0
      %v1665 = vsel %vm1646, %v1613, 0
      %v1667 = vsel %vm1646, %v1615, 0
      %v1669 = vsel %vm1646, %v1617, 0
      %v1671 = vsel %vm1646, %v1619, 0
      %v1673 = vsel %vm1646, %v1621, 0
      %v1675 = vsel %vm1646, %v1623, 0
      %v1677 = vsel %vm1646, %v1625, 0
      %vm1679 = vcmask 1041408
      %v1681 = vsel %vm1679, %v1643, 0
      %1683 = vmatprep.subr.bf16.mxu0 0
      %1684 = vmatpush1.bf16.msra.mxu0 %v1641
      %1685 = vmatprep.subr.bf16.mxu0 0
      %1686 = vmatpush1.bf16.msra.mxu0 %v1642
      %1687 = vmatprep.subr.bf16.mxu0 0
      %1688 = vmatpush1.bf16.msra.mxu0 %v1681
      %1689 = vmatprep.subr.bf16.mxu0 0
      %1690 = vmatpush1.bf16.msra.mxu0 0
      %1691 = vmatprep.subr.bf16.mxu0 0
      %1692 = vmatpush1.bf16.msra.mxu0 0
      %1693 = vmatprep.subr.bf16.mxu0 0
      %1694 = vmatpush1.bf16.msra.mxu0 0
      %1695 = vmatprep.subr.bf16.mxu0 0
      %1696 = vmatpush1.bf16.msra.mxu0 0
      %1697 = vmatprep.subr.bf16.mxu0 0
      %1698 = vmatpush1.bf16.msra.mxu0 0
      %1699 = vmatprep.subr.bf16.mxu0 0
      %1700 = vmatpush1.bf16.msra.mxu0 0
      %1701 = vmatprep.subr.bf16.mxu0 0
      %1702 = vmatpush1.bf16.msra.mxu0 0
      %1703 = vmatprep.subr.bf16.mxu0 0
      %1704 = vmatpush1.bf16.msra.mxu0 0
      %1705 = vmatprep.subr.bf16.mxu0 0
      %1706 = vmatpush1.bf16.msra.mxu0 0
      %1707 = vmatprep.subr.bf16.mxu0 0
      %1708 = vmatpush1.bf16.msra.mxu0 0
      %1709 = vmatprep.subr.bf16.mxu0 0
      %1710 = vmatpush1.bf16.msra.mxu0 0
      %1711 = vmatprep.subr.bf16.mxu0 0
      %1712 = vmatpush1.bf16.msra.mxu0 0
      %1713 = vmatprep.subr.bf16.mxu0 0
      %1714 = vmatpush1.bf16.msra.mxu0 0
      %1715 = vmatprep.mubr.bf16.mxu0 0
      %1716 = vmatmul.mubr.bf16.gmra.mrb[0].mxu0 %v1647
      %v1717 = vpop.f32.mrb[0].mxu0
      %v1718 = vadd.f32 0.0, %v1717
      %v1719 = vpop.f32.mrb[0].mxu0
      %v1720 = vpop.f32.mrb[0].mxu0
      %v1721 = vadd.f32 0.0, %v1720
      %v1722 = vpop.f32.mrb[0].mxu0
      %1723 = vmatprep.mubr.bf16.mxu0 0
      %1724 = vmatmul.mubr.bf16.gmra.mrb[0].mxu0 %v1649
      %v1725 = vpop.f32.mrb[0].mxu0
      %v1726 = vadd.f32 0.0, %v1725
      %v1727 = vpop.f32.mrb[0].mxu0
      %v1728 = vpop.f32.mrb[0].mxu0
      %v1729 = vadd.f32 0.0, %v1728
      %v1730 = vpop.f32.mrb[0].mxu0
      %1731 = vmatprep.mubr.bf16.mxu0 0
      %1732 = vmatmul.mubr.bf16.gmra.mrb[0].mxu0 %v1651
      %v1733 = vpop.f32.mrb[0].mxu0
      %v1734 = vadd.f32 0.0, %v1733
      %v1735 = vpop.f32.mrb[0].mxu0
      %v1736 = vpop.f32.mrb[0].mxu0
      %v1737 = vadd.f32 0.0, %v1736
      %v1738 = vpop.f32.mrb[0].mxu0
      %1739 = vmatprep.mubr.bf16.mxu0 0
      %1740 = vmatmul.mubr.bf16.gmra.mrb[0].mxu0 %v1653
      %v1741 = vpop.f32.mrb[0].mxu0
      %v1742 = vadd.f32 0.0, %v1741
      %v1743 = vpop.f32.mrb[0].mxu0
      %v1744 = vpop.f32.mrb[0].mxu0
      %v1745 = vadd.f32 0.0, %v1744
      %v1746 = vpop.f32.mrb[0].mxu0
      %1747 = vmatprep.mubr.bf16.mxu0 0
      %1748 = vmatmul.mubr.bf16.gmra.mrb[0].mxu0 %v1655
      %v1749 = vpop.f32.mrb[0].mxu0
      %v1750 = vadd.f32 0.0, %v1749
      %v1751 = vpop.f32.mrb[0].mxu0
      %v1752 = vpop.f32.mrb[0].mxu0
      %v1753 = vadd.f32 0.0, %v1752
      %v1754 = vpop.f32.mrb[0].mxu0
      %1755 = vmatprep.mubr.bf16.mxu0 0
      %1756 = vmatmul.mubr.bf16.gmra.mrb[0].mxu0 %v1657
      %v1757 = vpop.f32.mrb[0].mxu0
      %v1758 = vadd.f32 0.0, %v1757
      %v1759 = vpop.f32.mrb[0].mxu0
      %v1760 = vpop.f32.mrb[0].mxu0
      %v1761 = vadd.f32 0.0, %v1760
      %v1762 = vpop.f32.mrb[0].mxu0
      %1763 = vmatprep.mubr.bf16.mxu0 0
      %1764 = vmatmul.mubr.bf16.gmra.mrb[0].mxu0 %v1659
      %v1765 = vpop.f32.mrb[0].mxu0
      %v1766 = vadd.f32 0.0, %v1765
      %v1767 = vpop.f32.mrb[0].mxu0
      %v1768 = vpop.f32.mrb[0].mxu0
      %v1769 = vadd.f32 0.0, %v1768
      %v1770 = vpop.f32.mrb[0].mxu0
      %1771 = vmatprep.mubr.bf16.mxu0 0
      %1772 = vmatmul.mubr.bf16.gmra.mrb[0].mxu0 %v1661
      %v1773 = vpop.f32.mrb[0].mxu0
      %v1774 = vadd.f32 0.0, %v1773
      %v1775 = vpop.f32.mrb[0].mxu0
      %v1776 = vpop.f32.mrb[0].mxu0
      %v1777 = vadd.f32 0.0, %v1776
      %v1778 = vpop.f32.mrb[0].mxu0
      %1779 = vmatprep.mubr.bf16.mxu0 0
      %1780 = vmatmul.mubr.bf16.gmra.mrb[0].mxu0 %v1663
      %v1781 = vpop.f32.mrb[0].mxu0
      %v1782 = vadd.f32 0.0, %v1781
      %v1783 = vpop.f32.mrb[0].mxu0
      %v1784 = vpop.f32.mrb[0].mxu0
      %v1785 = vadd.f32 0.0, %v1784
      %v1786 = vpop.f32.mrb[0].mxu0
      %1787 = vmatprep.mubr.bf16.mxu0 0
      %1788 = vmatmul.mubr.bf16.gmra.mrb[0].mxu0 %v1665
      %v1789 = vpop.f32.mrb[0].mxu0
      %v1790 = vadd.f32 0.0, %v1789
      %v1791 = vpop.f32.mrb[0].mxu0
      %v1792 = vpop.f32.mrb[0].mxu0
      %v1793 = vadd.f32 0.0, %v1792
      %v1794 = vpop.f32.mrb[0].mxu0
      %1795 = vmatprep.mubr.bf16.mxu0 0
      %1796 = vmatmul.mubr.bf16.gmra.mrb[0].mxu0 %v1667
      %v1797 = vpop.f32.mrb[0].mxu0
      %v1798 = vadd.f32 0.0, %v1797
      %v1799 = vpop.f32.mrb[0].mxu0
      %v1800 = vpop.f32.mrb[0].mxu0
      %v1801 = vadd.f32 0.0, %v1800
      %v1802 = vpop.f32.mrb[0].mxu0
      %1803 = vmatprep.mubr.bf16.mxu0 0
      %1804 = vmatmul.mubr.bf16.gmra.mrb[0].mxu0 %v1669
      %v1805 = vpop.f32.mrb[0].mxu0
      %v1806 = vadd.f32 0.0, %v1805
      %v1807 = vpop.f32.mrb[0].mxu0
      %v1808 = vpop.f32.mrb[0].mxu0
      %v1809 = vadd.f32 0.0, %v1808
      %v1810 = vpop.f32.mrb[0].mxu0
      %1811 = vmatprep.mubr.bf16.mxu0 0
      %1812 = vmatmul.mubr.bf16.gmra.mrb[0].mxu0 %v1671
      %v1813 = vpop.f32.mrb[0].mxu0
      %v1814 = vadd.f32 0.0, %v1813
      %v1815 = vpop.f32.mrb[0].mxu0
      %v1816 = vpop.f32.mrb[0].mxu0
      %v1817 = vadd.f32 0.0, %v1816
      %v1818 = vpop.f32.mrb[0].mxu0
      %1819 = vmatprep.mubr.bf16.mxu0 0
      %1820 = vmatmul.mubr.bf16.gmra.mrb[0].mxu0 %v1673
      %v1821 = vpop.f32.mrb[0].mxu0
      %v1822 = vadd.f32 0.0, %v1821
      %v1823 = vpop.f32.mrb[0].mxu0
      %v1824 = vpop.f32.mrb[0].mxu0
      %v1825 = vadd.f32 0.0, %v1824
      %v1826 = vpop.f32.mrb[0].mxu0
      %1827 = vmatprep.mubr.bf16.mxu0 0
      %1828 = vmatmul.mubr.bf16.gmra.mrb[0].mxu0 %v1675
      %v1829 = vpop.f32.mrb[0].mxu0
      %v1830 = vadd.f32 0.0, %v1829
      %v1831 = vpop.f32.mrb[0].mxu0
      %v1832 = vpop.f32.mrb[0].mxu0
      %v1833 = vadd.f32 0.0, %v1832
      %v1834 = vpop.f32.mrb[0].mxu0
      %1835 = vmatprep.mubr.bf16.mxu0 0
      %1836 = vmatmul.mubr.bf16.gmra.mrb[0].mxu0 %v1677
      %v1837 = vpop.f32.mrb[0].mxu0
      %v1838 = vadd.f32 0.0, %v1837
      %v1839 = vpop.f32.mrb[0].mxu0
      %v1840 = vpop.f32.mrb[0].mxu0
      %v1841 = vadd.f32 0.0, %v1840
      %v1842 = vpop.f32.mrb[0].mxu0
      %1843 = vdwg.mxu0
      %v1844 = vpack.c.bf16 %v1721, %v1718
      %v1845 = vpack.c.bf16 %v1729, %v1726
      %v1846 = vpack.c.bf16 %v1737, %v1734
      %v1847 = vpack.c.bf16 %v1745, %v1742
      %v1848 = vpack.c.bf16 %v1753, %v1750
      %v1849 = vpack.c.bf16 %v1761, %v1758
      %v1850 = vpack.c.bf16 %v1769, %v1766
      %v1851 = vpack.c.bf16 %v1777, %v1774
      %v1852 = vpack.c.bf16 %v1785, %v1782
      %v1853 = vpack.c.bf16 %v1793, %v1790
      %v1854 = vpack.c.bf16 %v1801, %v1798
      %v1855 = vpack.c.bf16 %v1809, %v1806
      %v1856 = vpack.c.bf16 %v1817, %v1814
      %v1857 = vpack.c.bf16 %v1825, %v1822
      %v1858 = vpack.c.bf16 %v1833, %v1830
      %v1859 = vpack.c.bf16 %v1841, %v1838
      %v1860 = vunpack.c.l.bf16 %v1844
      %v1861 = vunpack.c.h.bf16 %v1844
      %v1862 = vunpack.c.l.bf16 %v1845
      %v1863 = vunpack.c.h.bf16 %v1845
      %v1864 = vunpack.c.l.bf16 %v1846
      %v1865 = vunpack.c.h.bf16 %v1846
      %v1866 = vunpack.c.l.bf16 %v1847
      %v1867 = vunpack.c.h.bf16 %v1847
      %v1868 = vunpack.c.l.bf16 %v1848
      %v1869 = vunpack.c.h.bf16 %v1848
      %v1870 = vunpack.c.l.bf16 %v1849
      %v1871 = vunpack.c.h.bf16 %v1849
      %v1872 = vunpack.c.l.bf16 %v1850
      %v1873 = vunpack.c.h.bf16 %v1850
      %v1874 = vunpack.c.l.bf16 %v1851
      %v1875 = vunpack.c.h.bf16 %v1851
      %v1876 = vunpack.c.l.bf16 %v1852
      %v1877 = vunpack.c.h.bf16 %v1852
      %v1878 = vunpack.c.l.bf16 %v1853
      %v1879 = vunpack.c.h.bf16 %v1853
      %v1880 = vunpack.c.l.bf16 %v1854
      %v1881 = vunpack.c.h.bf16 %v1854
      %v1882 = vunpack.c.l.bf16 %v1855
      %v1883 = vunpack.c.h.bf16 %v1855
      %v1884 = vunpack.c.l.bf16 %v1856
      %v1885 = vunpack.c.h.bf16 %v1856
      %v1886 = vunpack.c.l.bf16 %v1857
      %v1887 = vunpack.c.h.bf16 %v1857
      %v1888 = vunpack.c.l.bf16 %v1858
      %v1889 = vunpack.c.h.bf16 %v1858
      %v1890 = vunpack.c.l.bf16 %v1859
      %v1891 = vunpack.c.h.bf16 %v1859
      %v1892 = vadd.f32 %v1860, %v1861
      %v1893 = vadd.f32 %v1892, %v1862
      %v1894 = vadd.f32 %v1893, %v1863
      %v1895 = vadd.f32 %v1894, %v1864
      %v1896 = vadd.f32 %v1895, %v1865
      %v1897 = vadd.f32 %v1896, %v1866
      %v1898 = vadd.f32 %v1897, %v1867
      %v1899 = vadd.f32 %v1898, %v1868
      %v1900 = vadd.f32 %v1899, %v1869
      %v1901 = vadd.f32 %v1900, %v1870
      %v1902 = vadd.f32 %v1901, %v1871
      %v1903 = vadd.f32 %v1902, %v1872
      %v1904 = vadd.f32 %v1903, %v1873
      %v1905 = vadd.f32 %v1904, %v1874
      %v1906 = vadd.f32 %v1905, %v1875
      %v1907 = vadd.f32 %v1906, %v1876
      %v1908 = vadd.f32 %v1907, %v1877
      %v1909 = vadd.f32 %v1908, %v1878
      %v1910 = vadd.f32 %v1909, %v1879
      %v1911 = vadd.f32 %v1910, %v1880
      %v1912 = vadd.f32 %v1911, %v1881
      %v1913 = vadd.f32 %v1912, %v1882
      %v1914 = vadd.f32 %v1913, %v1883
      %v1915 = vadd.f32 %v1914, %v1884
      %v1916 = vadd.f32 %v1915, %v1885
      %v1917 = vadd.f32 %v1916, %v1886
      %v1918 = vadd.f32 %v1917, %v1887
      %v1919 = vadd.f32 %v1918, %v1888
      %v1920 = vadd.f32 %v1919, %v1889
      %v1921 = vadd.f32 %v1920, %v1890
      %v1922 = vadd.f32 %v1921, %v1891
      %v1923 = vrot.slane %v1922, 4
      %v1924 = vadd.f32 %v1922, %v1923
      %v1925 = vrot.slane %v1924, 2
      %v1926 = vadd.f32 %v1924, %v1925
      %v1927 = vrot.slane %v1926, 1
      %v1928 = vadd.f32 %v1926, %v1927
      %1929 = vst [vmem:[%s244] sm:$0x1] %v1928
      %v1930 = vmul.f32 %v1860, %v1860
      %v1931 = vmul.f32 %v1861, %v1861
      %v1932 = vmul.f32 %v1862, %v1862
      %v1933 = vmul.f32 %v1863, %v1863
      %v1934 = vmul.f32 %v1864, %v1864
      %v1935 = vmul.f32 %v1865, %v1865
      %v1936 = vmul.f32 %v1866, %v1866
      %v1937 = vmul.f32 %v1867, %v1867
      %v1938 = vmul.f32 %v1868, %v1868
      %v1939 = vmul.f32 %v1869, %v1869
      %v1940 = vmul.f32 %v1870, %v1870
      %v1941 = vmul.f32 %v1871, %v1871
      %v1942 = vmul.f32 %v1872, %v1872
      %v1943 = vmul.f32 %v1873, %v1873
      %v1944 = vmul.f32 %v1874, %v1874
      %v1945 = vmul.f32 %v1875, %v1875
      %v1946 = vmul.f32 %v1876, %v1876
      %v1947 = vmul.f32 %v1877, %v1877
      %v1948 = vmul.f32 %v1878, %v1878
      %v1949 = vmul.f32 %v1879, %v1879
      %v1950 = vmul.f32 %v1880, %v1880
      %v1951 = vmul.f32 %v1881, %v1881
      %v1952 = vmul.f32 %v1882, %v1882
      %v1953 = vmul.f32 %v1883, %v1883
      %v1954 = vmul.f32 %v1884, %v1884
      %v1955 = vmul.f32 %v1885, %v1885
      %v1956 = vmul.f32 %v1886, %v1886
      %v1957 = vmul.f32 %v1887, %v1887
      %v1958 = vmul.f32 %v1888, %v1888
      %v1959 = vmul.f32 %v1889, %v1889
      %v1960 = vmul.f32 %v1890, %v1890
      %v1961 = vmul.f32 %v1891, %v1891
      %v1962 = vadd.f32 %v1930, %v1931
      %v1963 = vadd.f32 %v1962, %v1932
      %v1964 = vadd.f32 %v1963, %v1933
      %v1965 = vadd.f32 %v1964, %v1934
      %v1966 = vadd.f32 %v1965, %v1935
      %v1967 = vadd.f32 %v1966, %v1936
      %v1968 = vadd.f32 %v1967, %v1937
      %v1969 = vadd.f32 %v1968, %v1938
      %v1970 = vadd.f32 %v1969, %v1939
      %v1971 = vadd.f32 %v1970, %v1940
      %v1972 = vadd.f32 %v1971, %v1941
      %v1973 = vadd.f32 %v1972, %v1942
      %v1974 = vadd.f32 %v1973, %v1943
      %v1975 = vadd.f32 %v1974, %v1944
      %v1976 = vadd.f32 %v1975, %v1945
      %v1977 = vadd.f32 %v1976, %v1946
      %v1978 = vadd.f32 %v1977, %v1947
      %v1979 = vadd.f32 %v1978, %v1948
      %v1980 = vadd.f32 %v1979, %v1949
      %v1981 = vadd.f32 %v1980, %v1950
      %v1982 = vadd.f32 %v1981, %v1951
      %v1983 = vadd.f32 %v1982, %v1952
      %v1984 = vadd.f32 %v1983, %v1953
      %v1985 = vadd.f32 %v1984, %v1954
      %v1986 = vadd.f32 %v1985, %v1955
      %v1987 = vadd.f32 %v1986, %v1956
      %v1988 = vadd.f32 %v1987, %v1957
      %v1989 = vadd.f32 %v1988, %v1958
      %v1990 = vadd.f32 %v1989, %v1959
      %v1991 = vadd.f32 %v1990, %v1960
      %v1992 = vadd.f32 %v1991, %v1961
      %v1993 = vrot.slane %v1992, 4
      %v1994 = vadd.f32 %v1992, %v1993
      %v1995 = vrot.slane %v1994, 2
      %v1996 = vadd.f32 %v1994, %v1995
      %v1997 = vrot.slane %v1996, 1
      %v1998 = vadd.f32 %v1996, %v1997
      %1999 = vst [vmem:[%s250] sm:$0x1] %v1998
      %2000 = vxpose.xlu0.b32.start [1/16] %v1718, 128
      %2001 = vxpose.xlu0.b32.cont [2/16] %v1721, 128
      %2002 = vxpose.xlu0.b32.cont [3/16] %v1726, 128
      %2003 = vxpose.xlu0.b32.cont [4/16] %v1729, 128
      %2004 = vxpose.xlu0.b32.cont [5/16] %v1734, 128
      %2005 = vxpose.xlu0.b32.cont [6/16] %v1737, 128
      %2006 = vxpose.xlu0.b32.cont [7/16] %v1742, 128
      %2007 = vxpose.xlu0.b32.cont [8/16] %v1745, 128
      %2008 = vxpose.xlu0.b32.cont [9/16] %v1750, 128
      %2009 = vxpose.xlu0.b32.cont [10/16] %v1753, 128
      %2010 = vxpose.xlu0.b32.cont [11/16] %v1758, 128
      %2011 = vxpose.xlu0.b32.cont [12/16] %v1761, 128
      %2012 = vxpose.xlu0.b32.cont [13/16] %v1766, 128
      %2013 = vxpose.xlu0.b32.cont [14/16] %v1769, 128
      %2014 = vxpose.xlu0.b32.cont [15/16] %v1774, 128
      %2015 = vxpose.xlu0.b32.end [16/16] %v1777, 128
      %v2016 = vpop.trf.xlu0
      %v2017 = vpop.trf.xlu0
      %v2018 = vpop.trf.xlu0
      %v2019 = vpop.trf.xlu0
      %v2020 = vpop.trf.xlu0
      %v2021 = vpop.trf.xlu0
      %v2022 = vpop.trf.xlu0
      %v2023 = vpop.trf.xlu0
      %v2024 = vpop.trf.xlu0
      %v2025 = vpop.trf.xlu0
      %v2026 = vpop.trf.xlu0
      %v2027 = vpop.trf.xlu0
      %v2028 = vpop.trf.xlu0
      %v2029 = vpop.trf.xlu0
      %v2030 = vpop.trf.xlu0
      %v2031 = vpop.trf.xlu0
      %2032 = vxpose.xlu0.b32.start [1/16] %v1782, 128
      %2033 = vxpose.xlu0.b32.cont [2/16] %v1785, 128
      %2034 = vxpose.xlu0.b32.cont [3/16] %v1790, 128
      %2035 = vxpose.xlu0.b32.cont [4/16] %v1793, 128
      %2036 = vxpose.xlu0.b32.cont [5/16] %v1798, 128
      %2037 = vxpose.xlu0.b32.cont [6/16] %v1801, 128
      %2038 = vxpose.xlu0.b32.cont [7/16] %v1806, 128
      %2039 = vxpose.xlu0.b32.cont [8/16] %v1809, 128
      %2040 = vxpose.xlu0.b32.cont [9/16] %v1814, 128
      %2041 = vxpose.xlu0.b32.cont [10/16] %v1817, 128
      %2042 = vxpose.xlu0.b32.cont [11/16] %v1822, 128
      %2043 = vxpose.xlu0.b32.cont [12/16] %v1825, 128
      %2044 = vxpose.xlu0.b32.cont [13/16] %v1830, 128
      %2045 = vxpose.xlu0.b32.cont [14/16] %v1833, 128
      %2046 = vxpose.xlu0.b32.cont [15/16] %v1838, 128
      %2047 = vxpose.xlu0.b32.end [16/16] %v1841, 128
      %v2048 = vpop.trf.xlu0
      %v2049 = vpop.trf.xlu0
      %v2050 = vpop.trf.xlu0
      %v2051 = vpop.trf.xlu0
      %v2052 = vpop.trf.xlu0
      %v2053 = vpop.trf.xlu0
      %v2054 = vpop.trf.xlu0
      %v2055 = vpop.trf.xlu0
      %v2056 = vpop.trf.xlu0
      %v2057 = vpop.trf.xlu0
      %v2058 = vpop.trf.xlu0
      %v2059 = vpop.trf.xlu0
      %v2060 = vpop.trf.xlu0
      %v2061 = vpop.trf.xlu0
      %v2062 = vpop.trf.xlu0
      %v2063 = vpop.trf.xlu0
      %v2064 = vpack.c.bf16 %v2016, %v2016
      %v2065 = vpack.c.bf16 %v2048, %v2048
      %v2068 = vcombine.low %v2064, %v2065
      %v2070 = vunpack.c.l.s4 1966171168
      %v2071 = vunpack.c.0.s8 %v2070
      %v2072 = vlaneseq
      %v2073 = vshrl.u32 %v2072, 7
      %v2074 = vsub.s32 %v2071, %v2073
      %v2075 = vrot.slane %v2068, %v2074
      %v2076 = vcombine.high %v2075, %v2075
      %v2078 = vunpack.c.l.s4 1966171168
      %v2079 = vunpack.c.0.s8 %v2078
      %v2080 = vlaneseq
      %v2081 = vshrl.u32 %v2080, 7
      %v2082 = vsub.s32 %v2079, %v2081
      %v2083 = vrot.slane %v2075, %v2082
      %v2085 = vunpack.c.l.s4 1966171168
      %v2086 = vunpack.c.0.s8 %v2085
      %v2087 = vlaneseq
      %v2088 = vshrl.u32 %v2087, 7
      %v2089 = vsub.s32 %v2086, %v2088
      %v2090 = vrot.slane %v2076, %v2089
      %v2091 = vcombine.high %v2083, %v2083
      %v2092 = vcombine.high %v2090, %v2090
      %v2093 = vunpack.i.l.s16 %v2083
      %v2094 = vunpack.i.h.s16 %v2083
      %v2095 = vunpack.i.l.s16 %v2090
      %v2096 = vunpack.i.h.s16 %v2090
      %v2097 = vunpack.i.l.s16 %v2091
      %v2098 = vunpack.i.h.s16 %v2091
      %v2099 = vunpack.i.l.s16 %v2092
      %v2100 = vunpack.i.h.s16 %v2092
      %v2101 = vpack.i.b16 %v2093, %v2093
      %v2102 = vpack.i.b16 %v2094, %v2094
      %v2103 = vpack.i.b16 %v2095, %v2095
      %v2104 = vpack.i.b16 %v2096, %v2096
      %v2105 = vpack.i.b16 %v2097, %v2097
      %v2106 = vpack.i.b16 %v2098, %v2098
      %v2107 = vpack.i.b16 %v2099, %v2099
      %v2108 = vpack.i.b16 %v2100, %v2100
      %vm2117 = vcmask 1040384
      %vm2118 = vsmask.f32 256
      %vm2119 = vmand %vm2117, %vm2118
      %vm2120 = vcmask 1041409
      %vm2121 = vsmask.f32 1280
      %vm2122 = vmand %vm2120, %vm2121
      %vm2123 = vmor %vm2122, %vm2119
      %v2124 = vld [vmem:[%s238] sm:$0x3]
      %v2125 = vsel %vm2123, %v2101, %v2124
      %2126 = vst [vmem:[%s238] sm:$0x3] %v2125
      %v2127 = vld [vmem:[%s238 + $0x2] sm:$0x3]
      %v2128 = vsel %vm2123, %v2102, %v2127
      %2129 = vst [vmem:[%s238 + $0x2] sm:$0x3] %v2128
      %v2130 = vld [vmem:[%s238 + $0x4] sm:$0x3]
      %v2131 = vsel %vm2123, %v2103, %v2130
      %2132 = vst [vmem:[%s238 + $0x4] sm:$0x3] %v2131
      %v2133 = vld [vmem:[%s238 + $0x6] sm:$0x3]
      %v2134 = vsel %vm2123, %v2104, %v2133
      %2135 = vst [vmem:[%s238 + $0x6] sm:$0x3] %v2134
      %v2136 = vld [vmem:[%s238 + $0x8] sm:$0x3]
      %v2137 = vsel %vm2123, %v2105, %v2136
      %2138 = vst [vmem:[%s238 + $0x8] sm:$0x3] %v2137
      %v2139 = vld [vmem:[%s238 + $0xa] sm:$0x3]
      %v2140 = vsel %vm2123, %v2106, %v2139
      %2141 = vst [vmem:[%s238 + $0xa] sm:$0x3] %v2140
      %v2142 = vld [vmem:[%s238 + $0xc] sm:$0x3]
      %v2143 = vsel %vm2123, %v2107, %v2142
      %2144 = vst [vmem:[%s238 + $0xc] sm:$0x3] %v2143
      %v2145 = vld [vmem:[%s238 + $0xe] sm:$0x3]
      %v2146 = vsel %vm2123, %v2108, %v2145
      %2147 = vst [vmem:[%s238 + $0xe] sm:$0x3] %v2146
      %p2148 = scmp.lt.s32.totalorder %s20, 1
      %s2149 = scalar_select %p2148, %s20, 1
      %p2150 = scmp.lt.s32.totalorder %s21, 0
      %s2151 = scalar_select %p2150, %s21, 0
      %s2152 = smul.addr %s2151, 2
      %s2153 = smul.addr %s2149, 16
      %s2154 = sadd.s32 %s2152, %s2153
      %s2155 = scalar_lea.vmem %s2, %s2154
      %p2156 = scmp.lt.s32.totalorder %s20, 1
      %s2157 = scalar_select %p2156, %s20, 1
      %p2158 = scmp.lt.s32.totalorder %s21, 0
      %s2159 = scalar_select %p2158, %s21, 0
      %s2160 = sadd.s32 %s2159, %s2157
      %s2161 = scalar_lea.vmem %s3, %s2160
      %p2162 = scmp.lt.s32.totalorder %s20, 1
      %s2163 = scalar_select %p2162, %s20, 1
      %p2164 = scmp.lt.s32.totalorder %s21, 0
      %s2165 = scalar_select %p2164, %s21, 0
      %s2166 = sadd.s32 %s2165, %s2163
      %s2167 = scalar_lea.vmem %s4, %s2166
      // Predicated region
      $region29: #{basic_conv2d_forward.2} parent=27 // pred_check
        %p2168 = pneg %p95
      $region30: #{basic_conv2d_forward.2} parent=27 // pred_check_branch
        %2170 = sbr.rel (%p2168) target = $region32
      $region31: #{basic_conv2d_forward.2} parent=27 // pred_region
        _
      $region32: #{basic_conv2d_forward.2} parent=27 // pred_fallthru
        _
      // Predicated region
      $region33: #{basic_conv2d_forward.2} parent=27 // pred_check
        %p2171 = pneg %p123
      $region34: #{basic_conv2d_forward.2} parent=27 // pred_check_branch
        %2173 = sbr.rel (%p2171) target = $region36
      $region35: #{basic_conv2d_forward.2} parent=27 // pred_region
        _
      $region36: #{basic_conv2d_forward.2} parent=27 // pred_fallthru
        _
      // Predicated region
      $region37: #{basic_conv2d_forward.2} parent=27 // pred_check
        %p2174 = pneg %p151
      $region38: #{basic_conv2d_forward.2} parent=27 // pred_check_branch
        %2176 = sbr.rel (%p2174) target = $region40
      $region39: #{basic_conv2d_forward.2} parent=27 // pred_region
        _
      $region40: #{basic_conv2d_forward.2} parent=27 // pred_fallthru
        _
    $region28: #{basic_conv2d_forward.2} parent=5 // pred_fallthru
      _
    %p2177 = scmp.le.s32.totalorder 2, %s11
    // Predicated region
    $region41: #{basic_conv2d_forward.2} parent=5 // pred_check
      %p2178 = pneg %p2177
    $region42: #{basic_conv2d_forward.2} parent=5 // pred_check_branch
      %2180 = sbr.rel (%p2178) target = $region44
    $region43: #{basic_conv2d_forward.2} parent=5 // pred_region
      %s2181 = ssub.s32 %s11, 2
      // Predicated region
      $region45: #{basic_conv2d_forward.2} parent=43 // pred_check
        %p2182 = pneg %p101
      $region46: #{basic_conv2d_forward.2} parent=43 // pred_check_branch
        %2184 = sbr.rel (%p2182) target = $region48
      $region47: #{basic_conv2d_forward.2} parent=43 // pred_region
        %p2185 = scmp.lt.s32.totalorder %s22, 1
        %s2186 = scalar_select %p2185, %s22, 1
        %p2187 = scmp.lt.s32.totalorder %s23, 0
        %s2188 = scalar_select %p2187, %s23, 0
        %s2189 = smul.addr %s2188, 2
        %s2190 = smul.addr %s2186, 16
        %s2191 = sadd.s32 %s2189, %s2190
        %s2192 = scalar_lea.vmem %s2, %s2191
      $region48: #{basic_conv2d_forward.2} parent=43 // pred_fallthru
        _
      // Predicated region
      $region49: #{basic_conv2d_forward.2} parent=43 // pred_check
        %p2193 = pneg %p129
      $region50: #{basic_conv2d_forward.2} parent=43 // pred_check_branch
        %2195 = sbr.rel (%p2193) target = $region52
      $region51: #{basic_conv2d_forward.2} parent=43 // pred_region
        %p2196 = scmp.lt.s32.totalorder %s22, 1
        %s2197 = scalar_select %p2196, %s22, 1
        %p2198 = scmp.lt.s32.totalorder %s23, 0
        %s2199 = scalar_select %p2198, %s23, 0
        %s2200 = sadd.s32 %s2199, %s2197
        %s2201 = scalar_lea.vmem %s3, %s2200
      $region52: #{basic_conv2d_forward.2} parent=43 // pred_fallthru
        _
      // Predicated region
      $region53: #{basic_conv2d_forward.2} parent=43 // pred_check
        %p2202 = pneg %p157
      $region54: #{basic_conv2d_forward.2} parent=43 // pred_check_branch
        %2204 = sbr.rel (%p2202) target = $region56
      $region55: #{basic_conv2d_forward.2} parent=43 // pred_region
        %p2205 = scmp.lt.s32.totalorder %s22, 1
        %s2206 = scalar_select %p2205, %s22, 1
        %p2207 = scmp.lt.s32.totalorder %s23, 0
        %s2208 = scalar_select %p2207, %s23, 0
        %s2209 = sadd.s32 %s2208, %s2206
        %s2210 = scalar_lea.vmem %s4, %s2209
      $region56: #{basic_conv2d_forward.2} parent=43 // pred_fallthru
        _
    $region44: #{basic_conv2d_forward.2} parent=5 // pred_fallthru
      _
  $region6: #{basic_conv2d_forward.2} parent=0 // loop_footer
    %s15 = sadd.s32 1, %s11
  $region7: #{basic_conv2d_forward.2} parent=0 // loop_footer_branch
    %10 = sbr.rel target = $region3
  $region8: #{basic_conv2d_forward.2} parent=0 // loop_exit
    _

</llo_original>
